<compile_context>
chip_gen: v7x
topology: tpu7x:2x2x1
jax: 0.10.0
libtpu: 0.0.40
codegen_flags: <defaults>
</compile_context>

<pallas_src>
import functools

import jax
import jax.numpy as jnp
import numpy as np
from jax.experimental import pallas as pl
from jax.experimental.pallas import tpu as pltpu


def _round_up(n, m):
    return ((n + m - 1) // m) * m


# ---------------------------------------------------------------------------
# Kernel
# ---------------------------------------------------------------------------
def vaencoder_kernel(x_ref, wx_ref, whh_ref, slab_ref, out_ref, *,
                     H, Z, row_bg, row_wrh, row_brh, row_w2, row_b2):
    TB = x_ref.shape[0]                   # T * B rows, time-major
    H2, G = whh_ref.shape                 # H2 = 128 (one lane tile), G = 4*H2
    B = out_ref.shape[0]
    P = out_ref.shape[1]                  # padded head width (>= 2Z)
    T = TB // B

    # ---- hoisted input projection (independent of h -> off the serial chain)
    # One (T*B, D) @ (D, 2G) bf16 matmul covers both directions, all steps.
    xw = jnp.dot(x_ref[...].astype(jnp.bfloat16), wx_ref[...],
                 preferred_element_type=jnp.float32)            # (T*B, 2G)
    b_g = slab_ref[row_bg:row_bg + 1, 0:G]                      # (1, G)
    xw_f = xw[:, :G] + b_g        # fwd gate pre-activations (+bias), all t
    xw_b = xw[:, G:]              # bwd gate pre-activations, all t

    whh = whh_ref[...]                                          # (H2, G) bf16
    h = jnp.zeros((B, H2), jnp.float32)   # [h_fwd | pad | h_bwd | pad]
    c = jnp.zeros((B, H2), jnp.float32)

    # Static unroll over time (T small); only h @ Whh sits on the serial chain.
    # Padded lanes stay exactly 0 (zero weight cols/rows, zero bias).
    for t in range(T):
        rt, rr = t * B, (T - 1 - t) * B   # fwd reads x[t], bwd reads x[T-1-t]
        gates = (xw_f[rt:rt + B] + xw_b[rr:rr + B]
                 + jnp.dot(h.astype(jnp.bfloat16), whh,
                           preferred_element_type=jnp.float32))  # (B, G)
        sg = jax.nn.sigmoid(gates)        # full width; EUP has slack
        i = sg[:, 0 * H2:1 * H2]          # 128-lane aligned slices -> free
        f = sg[:, 1 * H2:2 * H2]
        g = jnp.tanh(gates[:, 2 * H2:3 * H2])
        o = sg[:, 3 * H2:4 * H2]
        c = f * c + i * g
        h = o * jnp.tanh(c)

    # ---- epilogue: reduce_h -> softplus -> fused fc21 / exp(fc22) ----------
    wrh = slab_ref[row_wrh:row_wrh + H2, 0:H]                   # (H2, H)
    brh = slab_ref[row_brh:row_brh + 1, 0:H]                    # (1, H)
    w2 = slab_ref[row_w2:row_w2 + H, 0:P]                       # (H, P)
    b2 = slab_ref[row_b2:row_b2 + 1, 0:P]                       # (1, P)

    new_h = jnp.dot(h, wrh, preferred_element_type=jnp.float32) + brh
    # numerically stable softplus (== torch.nn.Softplus, beta=1, in f32)
    hidden = jnp.maximum(new_h, 0.0) + jnp.log1p(jnp.exp(-jnp.abs(new_h)))

    lin = jnp.dot(hidden, w2, preferred_element_type=jnp.float32) + b2  # (B,P)
    col = jax.lax.broadcasted_iota(jnp.int32, lin.shape, 1)
    # exp() is evaluated on every lane (incl. z_loc / padding lanes) and then
    # masked out by the select -- benign; do NOT reuse the exp'd slab elsewhere.
    out_ref[...] = jnp.where((col >= Z) & (col < 2 * Z), jnp.exp(lin), lin)


# ---------------------------------------------------------------------------
# Host-side weight prep (fused + lane-padded layouts)
# ---------------------------------------------------------------------------
def _expand_gate_cols(w, H, Hp):
    """(R, 4H) gate matrix (i|f|g|o) -> fwd/bwd padded layouts.

    Returns (fwd, bwd), each (R, 4*2*Hp): gate k of the forward layout lands
    in columns [k*2*Hp, k*2*Hp+H); the backward layout in
    [k*2*Hp+Hp, k*2*Hp+Hp+H).  All other (padding) columns are zero, so padded
    state lanes provably stay zero through the recurrence.
    """
    R = w.shape[0]
    G = 4 * 2 * Hp
    fwd = jnp.zeros((R, G), jnp.float32)
    bwd = jnp.zeros((R, G), jnp.float32)
    for k in range(4):
        chunk = w[:, k * H:(k + 1) * H]
        fwd = fwd.at[:, k * 2 * Hp:k * 2 * Hp + H].set(chunk)
        bwd = bwd.at[:, k * 2 * Hp + Hp:k * 2 * Hp + Hp + H].set(chunk)
    return fwd, bwd


def _pack_head_slab(b_g, wrh_p, brh, w2p, b2p):
    """Pack all small f32 tensors into one slab (single HBM->VMEM DMA)."""
    H2, H = wrh_p.shape
    P = w2p.shape[1]
    G = b_g.shape[1]
    W = max(G, P)
    row_bg = 0
    row_wrh = 8                                   # 8-row (sublane) aligned
    row_brh = _round_up(row_wrh + H2, 8)
    row_w2 = _round_up(row_brh + 1, 8)
    row_b2 = _round_up(row_w2 + H, 8)
    rows = _round_up(row_b2 + 1, 8)
    slab = jnp.zeros((rows, W), jnp.float32)
    slab = slab.at[row_bg, 0:G].set(b_g[0])
    slab = slab.at[row_wrh:row_wrh + H2, 0:H].set(wrh_p)
    slab = slab.at[row_brh, 0:H].set(brh[0])
    slab = slab.at[row_w2:row_w2 + H, 0:P].set(w2p)
    slab = slab.at[row_b2, 0:P].set(b2p[0])
    offs = dict(row_bg=row_bg, row_wrh=row_wrh, row_brh=row_brh,
                row_w2=row_w2, row_b2=row_b2)
    return slab, offs


# ---------------------------------------------------------------------------
# Wrapper
# ---------------------------------------------------------------------------
def vaencoder_forward(x, params):
    B, T, D = x.shape
    H = params["whh_f"].shape[0]
    Z = params["w21"].shape[1]
    Hp = _round_up(H, 64)                 # per-direction pad -> H2 = 2*Hp % 128 == 0
    H2 = 2 * Hp
    G = 4 * H2
    P = _round_up(2 * Z, 128)             # lane-dense fused head output

    # time-major flatten (single layout op on x; no concat/reverse copies)
    x_flat = jnp.transpose(x, (1, 0, 2)).reshape(T * B, D)      # row t*B+b = x[b,t]

    # fused / padded weights (constant-folded under jit since params are static)
    wih_f, _ = _expand_gate_cols(params["wih_f"], H, Hp)
    _, wih_b = _expand_gate_cols(params["wih_b"], H, Hp)
    wx = jnp.concatenate([wih_f, wih_b], axis=1).astype(jnp.bfloat16)  # (D, 2G)

    whh_f, _ = _expand_gate_cols(params["whh_f"], H, Hp)
    _, whh_b = _expand_gate_cols(params["whh_b"], H, Hp)
    whh = jnp.zeros((H2, G), jnp.float32)
    whh = whh.at[0:H].set(whh_f).at[Hp:Hp + H].set(whh_b)
    whh = whh.astype(jnp.bfloat16)                                     # (H2, G)

    bf_f, _ = _expand_gate_cols(params["b_f"], H, Hp)
    _, bb_b = _expand_gate_cols(params["b_b"], H, Hp)
    b_g = bf_f + bb_b                                                  # (1, G)

    wrh_p = jnp.zeros((H2, H), jnp.float32)
    wrh_p = wrh_p.at[0:H].set(params["wrh"][0:H])
    wrh_p = wrh_p.at[Hp:Hp + H].set(params["wrh"][H:2 * H])

    w2p = jnp.zeros((H, P), jnp.float32)
    w2p = w2p.at[:, 0:Z].set(params["w21"]).at[:, Z:2 * Z].set(params["w22"])
    b2p = jnp.zeros((1, P), jnp.float32)
    b2p = b2p.at[:, 0:Z].set(params["b21"]).at[:, Z:2 * Z].set(params["b22"])

    slab, offs = _pack_head_slab(b_g, wrh_p, params["brh"], w2p, b2p)

    kern = functools.partial(vaencoder_kernel, H=H, Z=Z, **offs)
    vmem = pl.BlockSpec(memory_space=pltpu.MemorySpace.VMEM)
    # Gridless: the whole working set is <1 MiB and T is serial.  For large B
    # on v7x, add grid=(B//TB,) with dimension_semantics=("parallel",) so both
    # TensorCores are used (and size tiles for 64 MiB VMEM, not 128 MiB).
    out = pl.pallas_call(
        kern,
        out_shape=jax.ShapeDtypeStruct((B, P), jnp.float32),
        in_specs=[vmem] * 4,
        out_specs=vmem,
    )(x_flat, wx, whh, slab)

    return out[:, :Z], out[:, Z:2 * Z]


# ---------------------------------------------------------------------------
# Pure-JAX reference (unfused f32 math) for validation
# ---------------------------------------------------------------------------
def reference_forward(x, params):
    B, T, D = x.shape
    H = params["whh_f"].shape[0]

    def cell(h, c, x_t, wih, whh, b):
        gates = x_t @ wih + h @ whh + b
        i, f, g, o = jnp.split(gates, 4, axis=-1)
        i, f, o = jax.nn.sigmoid(i), jax.nn.sigmoid(f), jax.nn.sigmoid(o)
        g = jnp.tanh(g)
        c = f * c + i * g
        h = o * jnp.tanh(c)
        return h, c

    hf = cf = jnp.zeros((B, H), jnp.float32)
    hb = cb = jnp.zeros((B, H), jnp.float32)
    for t in range(T):
        hf, cf = cell(hf, cf, x[:, t], params["wih_f"], params["whh_f"],
                      params["b_f"])
        hb, cb = cell(hb, cb, x[:, T - 1 - t], params["wih_b"],
                      params["whh_b"], params["b_b"])
    h_cat = jnp.concatenate([hf, hb], axis=1)
    new_h = h_cat @ params["wrh"] + params["brh"]
    hidden = jax.nn.softplus(new_h)
    z_loc = hidden @ params["w21"] + params["b21"]
    z_scale = jnp.exp(hidden @ params["w22"] + params["b22"])
    return z_loc, z_scale


def make_params(key, D, H, Z):
    ks = jax.random.split(key, 10)

    def xavier(k, shape):
        std = np.sqrt(2.0 / (shape[0] + shape[1]))
        return (std * jax.random.normal(k, shape)).astype(jnp.float32)

    return {
        # layer-0 LSTM, forward / backward direction (weights pre-transposed
        # to (in_features, 4H); gate column order i|f|g|o as in PyTorch)
        "wih_f": xavier(ks[0], (D, 4 * H)),
        "whh_f": xavier(ks[1], (H, 4 * H)),
        "b_f": jnp.zeros((1, 4 * H), jnp.float32),   # init_weight -> zeros
        "wih_b": xavier(ks[2], (D, 4 * H)),
        "whh_b": xavier(ks[3], (H, 4 * H)),
        "b_b": jnp.zeros((1, 4 * H), jnp.float32),   # init_weight -> zeros
        # reduce_h_W
        "wrh": xavier(ks[4], (2 * H, H)),
        "brh": (0.01 * jax.random.normal(ks[5], (1, H))).astype(jnp.float32),
        # fc21 / fc22
        "w21": xavier(ks[6], (H, Z)),
        "b21": (0.01 * jax.random.normal(ks[7], (1, Z))).astype(jnp.float32),
        "w22": xavier(ks[8], (H, Z)),
        "b22": (0.01 * jax.random.normal(ks[9], (1, Z))).astype(jnp.float32),
    }


if __name__ == "__main__":
    B, T, D, H, Z = 2, 8, 4, 32, 16   # batch, seq, input_size, hidden, z_dim

    key = jax.random.PRNGKey(0)
    pkey, xkey = jax.random.split(key)
    params = make_params(pkey, D, H, Z)
    x = jax.random.normal(xkey, (B, T, D), dtype=jnp.float32)

    fwd = jax.jit(functools.partial(vaencoder_forward, params=params))
    z_loc, z_scale = fwd(x)
    jax.block_until_ready((z_loc, z_scale))

    ref_loc, ref_scale = reference_forward(x, params)
    assert z_loc.shape == (B, Z) and z_scale.shape == (B, Z)
    # bf16 MXU operands (LSTM weights / recurrent state) -> looser tolerance
    # than the pure-f32 rev 2 (per the performance review).
    assert np.allclose(np.asarray(z_loc), np.asarray(ref_loc),
                       rtol=3e-2, atol=3e-2)
    assert np.allclose(np.asarray(z_scale), np.asarray(ref_scale),
                       rtol=3e-2, atol=3e-2)

    print("KERNEL_OK")
</pallas_src>

<mosaic_0001>
module attributes {stable_mosaic.version = 11 : i64} {
  func.func @vaencoder_kernel(%arg0: memref<16x4xf32, #tpu.memory_space<vmem>>, %arg1: memref<4x1024xbf16, #tpu.memory_space<vmem>>, %arg2: memref<128x512xbf16, #tpu.memory_space<vmem>>, %arg3: memref<184x512xf32, #tpu.memory_space<vmem>>, %arg4: memref<2x128xf32, #tpu.memory_space<vmem>>) attributes {dimension_semantics = [], scalar_prefetch = 0 : i64, scratch_operands = 0 : i64, tpu.core_type = #tpu.core_type<tc>} {
    %c0 = arith.constant 0 : index
    %c0_0 = arith.constant 0 : index
    %0 = vector.load %arg0[%c0, %c0_0] : memref<16x4xf32, #tpu.memory_space<vmem>>, vector<16x4xf32>
    %1 = arith.truncf %0 : vector<16x4xf32> to vector<16x4xbf16>
    %c0_1 = arith.constant 0 : index
    %c0_2 = arith.constant 0 : index
    %2 = vector.load %arg1[%c0_1, %c0_2] : memref<4x1024xbf16, #tpu.memory_space<vmem>>, vector<4x1024xbf16>
    %cst = arith.constant dense<0.000000e+00> : vector<16x1024xf32>
    %3 = tpu.matmul %1, %2, %cst {dimension_numbers = #tpu.dot_dimension_numbers<[1], [0], [0], [1], [0, 0, 1, 1], [], []>} : vector<16x4xbf16>, vector<4x1024xbf16>, vector<16x1024xf32> -> vector<16x1024xf32>
    %c0_3 = arith.constant 0 : index
    %c0_4 = arith.constant 0 : index
    %4 = vector.load %arg3[%c0_3, %c0_4] : memref<184x512xf32, #tpu.memory_space<vmem>>, vector<1x512xf32>
    %5 = vector.extract_strided_slice %3 {offsets = [0, 0], sizes = [16, 512], strides = [1, 1]} : vector<16x1024xf32> to vector<16x512xf32>
    %6 = vector.broadcast %4 : vector<1x512xf32> to vector<16x512xf32>
    %7 = arith.addf %5, %6 : vector<16x512xf32>
    %8 = vector.extract_strided_slice %3 {offsets = [0, 512], sizes = [16, 512], strides = [1, 1]} : vector<16x1024xf32> to vector<16x512xf32>
    %c0_5 = arith.constant 0 : index
    %c0_6 = arith.constant 0 : index
    %9 = vector.load %arg2[%c0_5, %c0_6] : memref<128x512xbf16, #tpu.memory_space<vmem>>, vector<128x512xbf16>
    %cst_7 = arith.constant 0.000000e+00 : f32
    %10 = vector.broadcast %cst_7 : f32 to vector<2x128xf32>
    %cst_8 = arith.constant 0.000000e+00 : f32
    %11 = vector.broadcast %cst_8 : f32 to vector<2x128xf32>
    %12 = vector.extract_strided_slice %7 {offsets = [0, 0], sizes = [2, 512], strides = [1, 1]} : vector<16x512xf32> to vector<2x512xf32>
    %13 = vector.extract_strided_slice %8 {offsets = [14, 0], sizes = [2, 512], strides = [1, 1]} : vector<16x512xf32> to vector<2x512xf32>
    %14 = arith.addf %12, %13 : vector<2x512xf32>
    %15 = arith.truncf %10 : vector<2x128xf32> to vector<2x128xbf16>
    %cst_9 = arith.constant dense<0.000000e+00> : vector<2x512xf32>
    %16 = tpu.matmul %15, %9, %cst_9 {dimension_numbers = #tpu.dot_dimension_numbers<[1], [0], [0], [1], [0, 0, 1, 1], [], []>} : vector<2x128xbf16>, vector<128x512xbf16>, vector<2x512xf32> -> vector<2x512xf32>
    %17 = arith.addf %14, %16 : vector<2x512xf32>
    %18 = arith.negf %17 : vector<2x512xf32>
    %19 = math.exp %18 : vector<2x512xf32>
    %cst_10 = arith.constant 1.000000e+00 : f32
    %20 = vector.broadcast %cst_10 : f32 to vector<2x512xf32>
    %21 = arith.addf %20, %19 : vector<2x512xf32>
    %22 = arith.divf %20, %21 : vector<2x512xf32>
    %23 = vector.extract_strided_slice %22 {offsets = [0, 0], sizes = [2, 128], strides = [1, 1]} : vector<2x512xf32> to vector<2x128xf32>
    %24 = vector.extract_strided_slice %22 {offsets = [0, 128], sizes = [2, 128], strides = [1, 1]} : vector<2x512xf32> to vector<2x128xf32>
    %25 = vector.extract_strided_slice %17 {offsets = [0, 256], sizes = [2, 128], strides = [1, 1]} : vector<2x512xf32> to vector<2x128xf32>
    %26 = math.tanh %25 : vector<2x128xf32>
    %27 = vector.extract_strided_slice %22 {offsets = [0, 384], sizes = [2, 128], strides = [1, 1]} : vector<2x512xf32> to vector<2x128xf32>
    %28 = arith.mulf %24, %11 : vector<2x128xf32>
    %29 = arith.mulf %23, %26 : vector<2x128xf32>
    %30 = arith.addf %28, %29 : vector<2x128xf32>
    %31 = math.tanh %30 : vector<2x128xf32>
    %32 = arith.mulf %27, %31 : vector<2x128xf32>
    %33 = vector.extract_strided_slice %7 {offsets = [2, 0], sizes = [2, 512], strides = [1, 1]} : vector<16x512xf32> to vector<2x512xf32>
    %34 = vector.extract_strided_slice %8 {offsets = [12, 0], sizes = [2, 512], strides = [1, 1]} : vector<16x512xf32> to vector<2x512xf32>
    %35 = arith.addf %33, %34 : vector<2x512xf32>
    %36 = arith.truncf %32 : vector<2x128xf32> to vector<2x128xbf16>
    %cst_11 = arith.constant dense<0.000000e+00> : vector<2x512xf32>
    %37 = tpu.matmul %36, %9, %cst_11 {dimension_numbers = #tpu.dot_dimension_numbers<[1], [0], [0], [1], [0, 0, 1, 1], [], []>} : vector<2x128xbf16>, vector<128x512xbf16>, vector<2x512xf32> -> vector<2x512xf32>
    %38 = arith.addf %35, %37 : vector<2x512xf32>
    %39 = arith.negf %38 : vector<2x512xf32>
    %40 = math.exp %39 : vector<2x512xf32>
    %cst_12 = arith.constant 1.000000e+00 : f32
    %41 = vector.broadcast %cst_12 : f32 to vector<2x512xf32>
    %42 = arith.addf %41, %40 : vector<2x512xf32>
    %43 = arith.divf %41, %42 : vector<2x512xf32>
    %44 = vector.extract_strided_slice %43 {offsets = [0, 0], sizes = [2, 128], strides = [1, 1]} : vector<2x512xf32> to vector<2x128xf32>
    %45 = vector.extract_strided_slice %43 {offsets = [0, 128], sizes = [2, 128], strides = [1, 1]} : vector<2x512xf32> to vector<2x128xf32>
    %46 = vector.extract_strided_slice %38 {offsets = [0, 256], sizes = [2, 128], strides = [1, 1]} : vector<2x512xf32> to vector<2x128xf32>
    %47 = math.tanh %46 : vector<2x128xf32>
    %48 = vector.extract_strided_slice %43 {offsets = [0, 384], sizes = [2, 128], strides = [1, 1]} : vector<2x512xf32> to vector<2x128xf32>
    %49 = arith.mulf %45, %30 : vector<2x128xf32>
    %50 = arith.mulf %44, %47 : vector<2x128xf32>
    %51 = arith.addf %49, %50 : vector<2x128xf32>
    %52 = math.tanh %51 : vector<2x128xf32>
    %53 = arith.mulf %48, %52 : vector<2x128xf32>
    %54 = vector.extract_strided_slice %7 {offsets = [4, 0], sizes = [2, 512], strides = [1, 1]} : vector<16x512xf32> to vector<2x512xf32>
    %55 = vector.extract_strided_slice %8 {offsets = [10, 0], sizes = [2, 512], strides = [1, 1]} : vector<16x512xf32> to vector<2x512xf32>
    %56 = arith.addf %54, %55 : vector<2x512xf32>
    %57 = arith.truncf %53 : vector<2x128xf32> to vector<2x128xbf16>
    %cst_13 = arith.constant dense<0.000000e+00> : vector<2x512xf32>
    %58 = tpu.matmul %57, %9, %cst_13 {dimension_numbers = #tpu.dot_dimension_numbers<[1], [0], [0], [1], [0, 0, 1, 1], [], []>} : vector<2x128xbf16>, vector<128x512xbf16>, vector<2x512xf32> -> vector<2x512xf32>
    %59 = arith.addf %56, %58 : vector<2x512xf32>
    %60 = arith.negf %59 : vector<2x512xf32>
    %61 = math.exp %60 : vector<2x512xf32>
    %cst_14 = arith.constant 1.000000e+00 : f32
    %62 = vector.broadcast %cst_14 : f32 to vector<2x512xf32>
    %63 = arith.addf %62, %61 : vector<2x512xf32>
    %64 = arith.divf %62, %63 : vector<2x512xf32>
    %65 = vector.extract_strided_slice %64 {offsets = [0, 0], sizes = [2, 128], strides = [1, 1]} : vector<2x512xf32> to vector<2x128xf32>
    %66 = vector.extract_strided_slice %64 {offsets = [0, 128], sizes = [2, 128], strides = [1, 1]} : vector<2x512xf32> to vector<2x128xf32>
    %67 = vector.extract_strided_slice %59 {offsets = [0, 256], sizes = [2, 128], strides = [1, 1]} : vector<2x512xf32> to vector<2x128xf32>
    %68 = math.tanh %67 : vector<2x128xf32>
    %69 = vector.extract_strided_slice %64 {offsets = [0, 384], sizes = [2, 128], strides = [1, 1]} : vector<2x512xf32> to vector<2x128xf32>
    %70 = arith.mulf %66, %51 : vector<2x128xf32>
    %71 = arith.mulf %65, %68 : vector<2x128xf32>
    %72 = arith.addf %70, %71 : vector<2x128xf32>
    %73 = math.tanh %72 : vector<2x128xf32>
    %74 = arith.mulf %69, %73 : vector<2x128xf32>
    %75 = vector.extract_strided_slice %7 {offsets = [6, 0], sizes = [2, 512], strides = [1, 1]} : vector<16x512xf32> to vector<2x512xf32>
    %76 = vector.extract_strided_slice %8 {offsets = [8, 0], sizes = [2, 512], strides = [1, 1]} : vector<16x512xf32> to vector<2x512xf32>
    %77 = arith.addf %75, %76 : vector<2x512xf32>
    %78 = arith.truncf %74 : vector<2x128xf32> to vector<2x128xbf16>
    %cst_15 = arith.constant dense<0.000000e+00> : vector<2x512xf32>
    %79 = tpu.matmul %78, %9, %cst_15 {dimension_numbers = #tpu.dot_dimension_numbers<[1], [0], [0], [1], [0, 0, 1, 1], [], []>} : vector<2x128xbf16>, vector<128x512xbf16>, vector<2x512xf32> -> vector<2x512xf32>
    %80 = arith.addf %77, %79 : vector<2x512xf32>
    %81 = arith.negf %80 : vector<2x512xf32>
    %82 = math.exp %81 : vector<2x512xf32>
    %cst_16 = arith.constant 1.000000e+00 : f32
    %83 = vector.broadcast %cst_16 : f32 to vector<2x512xf32>
    %84 = arith.addf %83, %82 : vector<2x512xf32>
    %85 = arith.divf %83, %84 : vector<2x512xf32>
    %86 = vector.extract_strided_slice %85 {offsets = [0, 0], sizes = [2, 128], strides = [1, 1]} : vector<2x512xf32> to vector<2x128xf32>
    %87 = vector.extract_strided_slice %85 {offsets = [0, 128], sizes = [2, 128], strides = [1, 1]} : vector<2x512xf32> to vector<2x128xf32>
    %88 = vector.extract_strided_slice %80 {offsets = [0, 256], sizes = [2, 128], strides = [1, 1]} : vector<2x512xf32> to vector<2x128xf32>
    %89 = math.tanh %88 : vector<2x128xf32>
    %90 = vector.extract_strided_slice %85 {offsets = [0, 384], sizes = [2, 128], strides = [1, 1]} : vector<2x512xf32> to vector<2x128xf32>
    %91 = arith.mulf %87, %72 : vector<2x128xf32>
    %92 = arith.mulf %86, %89 : vector<2x128xf32>
    %93 = arith.addf %91, %92 : vector<2x128xf32>
    %94 = math.tanh %93 : vector<2x128xf32>
    %95 = arith.mulf %90, %94 : vector<2x128xf32>
    %96 = vector.extract_strided_slice %7 {offsets = [8, 0], sizes = [2, 512], strides = [1, 1]} : vector<16x512xf32> to vector<2x512xf32>
    %97 = vector.extract_strided_slice %8 {offsets = [6, 0], sizes = [2, 512], strides = [1, 1]} : vector<16x512xf32> to vector<2x512xf32>
    %98 = arith.addf %96, %97 : vector<2x512xf32>
    %99 = arith.truncf %95 : vector<2x128xf32> to vector<2x128xbf16>
    %cst_17 = arith.constant dense<0.000000e+00> : vector<2x512xf32>
    %100 = tpu.matmul %99, %9, %cst_17 {dimension_numbers = #tpu.dot_dimension_numbers<[1], [0], [0], [1], [0, 0, 1, 1], [], []>} : vector<2x128xbf16>, vector<128x512xbf16>, vector<2x512xf32> -> vector<2x512xf32>
    %101 = arith.addf %98, %100 : vector<2x512xf32>
    %102 = arith.negf %101 : vector<2x512xf32>
    %103 = math.exp %102 : vector<2x512xf32>
    %cst_18 = arith.constant 1.000000e+00 : f32
    %104 = vector.broadcast %cst_18 : f32 to vector<2x512xf32>
    %105 = arith.addf %104, %103 : vector<2x512xf32>
    %106 = arith.divf %104, %105 : vector<2x512xf32>
    %107 = vector.extract_strided_slice %106 {offsets = [0, 0], sizes = [2, 128], strides = [1, 1]} : vector<2x512xf32> to vector<2x128xf32>
    %108 = vector.extract_strided_slice %106 {offsets = [0, 128], sizes = [2, 128], strides = [1, 1]} : vector<2x512xf32> to vector<2x128xf32>
    %109 = vector.extract_strided_slice %101 {offsets = [0, 256], sizes = [2, 128], strides = [1, 1]} : vector<2x512xf32> to vector<2x128xf32>
    %110 = math.tanh %109 : vector<2x128xf32>
    %111 = vector.extract_strided_slice %106 {offsets = [0, 384], sizes = [2, 128], strides = [1, 1]} : vector<2x512xf32> to vector<2x128xf32>
    %112 = arith.mulf %108, %93 : vector<2x128xf32>
    %113 = arith.mulf %107, %110 : vector<2x128xf32>
    %114 = arith.addf %112, %113 : vector<2x128xf32>
    %115 = math.tanh %114 : vector<2x128xf32>
    %116 = arith.mulf %111, %115 : vector<2x128xf32>
    %117 = vector.extract_strided_slice %7 {offsets = [10, 0], sizes = [2, 512], strides = [1, 1]} : vector<16x512xf32> to vector<2x512xf32>
    %118 = vector.extract_strided_slice %8 {offsets = [4, 0], sizes = [2, 512], strides = [1, 1]} : vector<16x512xf32> to vector<2x512xf32>
    %119 = arith.addf %117, %118 : vector<2x512xf32>
    %120 = arith.truncf %116 : vector<2x128xf32> to vector<2x128xbf16>
    %cst_19 = arith.constant dense<0.000000e+00> : vector<2x512xf32>
    %121 = tpu.matmul %120, %9, %cst_19 {dimension_numbers = #tpu.dot_dimension_numbers<[1], [0], [0], [1], [0, 0, 1, 1], [], []>} : vector<2x128xbf16>, vector<128x512xbf16>, vector<2x512xf32> -> vector<2x512xf32>
    %122 = arith.addf %119, %121 : vector<2x512xf32>
    %123 = arith.negf %122 : vector<2x512xf32>
    %124 = math.exp %123 : vector<2x512xf32>
    %cst_20 = arith.constant 1.000000e+00 : f32
    %125 = vector.broadcast %cst_20 : f32 to vector<2x512xf32>
    %126 = arith.addf %125, %124 : vector<2x512xf32>
    %127 = arith.divf %125, %126 : vector<2x512xf32>
    %128 = vector.extract_strided_slice %127 {offsets = [0, 0], sizes = [2, 128], strides = [1, 1]} : vector<2x512xf32> to vector<2x128xf32>
    %129 = vector.extract_strided_slice %127 {offsets = [0, 128], sizes = [2, 128], strides = [1, 1]} : vector<2x512xf32> to vector<2x128xf32>
    %130 = vector.extract_strided_slice %122 {offsets = [0, 256], sizes = [2, 128], strides = [1, 1]} : vector<2x512xf32> to vector<2x128xf32>
    %131 = math.tanh %130 : vector<2x128xf32>
    %132 = vector.extract_strided_slice %127 {offsets = [0, 384], sizes = [2, 128], strides = [1, 1]} : vector<2x512xf32> to vector<2x128xf32>
    %133 = arith.mulf %129, %114 : vector<2x128xf32>
    %134 = arith.mulf %128, %131 : vector<2x128xf32>
    %135 = arith.addf %133, %134 : vector<2x128xf32>
    %136 = math.tanh %135 : vector<2x128xf32>
    %137 = arith.mulf %132, %136 : vector<2x128xf32>
    %138 = vector.extract_strided_slice %7 {offsets = [12, 0], sizes = [2, 512], strides = [1, 1]} : vector<16x512xf32> to vector<2x512xf32>
    %139 = vector.extract_strided_slice %8 {offsets = [2, 0], sizes = [2, 512], strides = [1, 1]} : vector<16x512xf32> to vector<2x512xf32>
    %140 = arith.addf %138, %139 : vector<2x512xf32>
    %141 = arith.truncf %137 : vector<2x128xf32> to vector<2x128xbf16>
    %cst_21 = arith.constant dense<0.000000e+00> : vector<2x512xf32>
    %142 = tpu.matmul %141, %9, %cst_21 {dimension_numbers = #tpu.dot_dimension_numbers<[1], [0], [0], [1], [0, 0, 1, 1], [], []>} : vector<2x128xbf16>, vector<128x512xbf16>, vector<2x512xf32> -> vector<2x512xf32>
    %143 = arith.addf %140, %142 : vector<2x512xf32>
    %144 = arith.negf %143 : vector<2x512xf32>
    %145 = math.exp %144 : vector<2x512xf32>
    %cst_22 = arith.constant 1.000000e+00 : f32
    %146 = vector.broadcast %cst_22 : f32 to vector<2x512xf32>
    %147 = arith.addf %146, %145 : vector<2x512xf32>
    %148 = arith.divf %146, %147 : vector<2x512xf32>
    %149 = vector.extract_strided_slice %148 {offsets = [0, 0], sizes = [2, 128], strides = [1, 1]} : vector<2x512xf32> to vector<2x128xf32>
    %150 = vector.extract_strided_slice %148 {offsets = [0, 128], sizes = [2, 128], strides = [1, 1]} : vector<2x512xf32> to vector<2x128xf32>
    %151 = vector.extract_strided_slice %143 {offsets = [0, 256], sizes = [2, 128], strides = [1, 1]} : vector<2x512xf32> to vector<2x128xf32>
    %152 = math.tanh %151 : vector<2x128xf32>
    %153 = vector.extract_strided_slice %148 {offsets = [0, 384], sizes = [2, 128], strides = [1, 1]} : vector<2x512xf32> to vector<2x128xf32>
    %154 = arith.mulf %150, %135 : vector<2x128xf32>
    %155 = arith.mulf %149, %152 : vector<2x128xf32>
    %156 = arith.addf %154, %155 : vector<2x128xf32>
    %157 = math.tanh %156 : vector<2x128xf32>
    %158 = arith.mulf %153, %157 : vector<2x128xf32>
    %159 = vector.extract_strided_slice %7 {offsets = [14, 0], sizes = [2, 512], strides = [1, 1]} : vector<16x512xf32> to vector<2x512xf32>
    %160 = vector.extract_strided_slice %8 {offsets = [0, 0], sizes = [2, 512], strides = [1, 1]} : vector<16x512xf32> to vector<2x512xf32>
    %161 = arith.addf %159, %160 : vector<2x512xf32>
    %162 = arith.truncf %158 : vector<2x128xf32> to vector<2x128xbf16>
    %cst_23 = arith.constant dense<0.000000e+00> : vector<2x512xf32>
    %163 = tpu.matmul %162, %9, %cst_23 {dimension_numbers = #tpu.dot_dimension_numbers<[1], [0], [0], [1], [0, 0, 1, 1], [], []>} : vector<2x128xbf16>, vector<128x512xbf16>, vector<2x512xf32> -> vector<2x512xf32>
    %164 = arith.addf %161, %163 : vector<2x512xf32>
    %165 = arith.negf %164 : vector<2x512xf32>
    %166 = math.exp %165 : vector<2x512xf32>
    %cst_24 = arith.constant 1.000000e+00 : f32
    %167 = vector.broadcast %cst_24 : f32 to vector<2x512xf32>
    %168 = arith.addf %167, %166 : vector<2x512xf32>
    %169 = arith.divf %167, %168 : vector<2x512xf32>
    %170 = vector.extract_strided_slice %169 {offsets = [0, 0], sizes = [2, 128], strides = [1, 1]} : vector<2x512xf32> to vector<2x128xf32>
    %171 = vector.extract_strided_slice %169 {offsets = [0, 128], sizes = [2, 128], strides = [1, 1]} : vector<2x512xf32> to vector<2x128xf32>
    %172 = vector.extract_strided_slice %164 {offsets = [0, 256], sizes = [2, 128], strides = [1, 1]} : vector<2x512xf32> to vector<2x128xf32>
    %173 = math.tanh %172 : vector<2x128xf32>
    %174 = vector.extract_strided_slice %169 {offsets = [0, 384], sizes = [2, 128], strides = [1, 1]} : vector<2x512xf32> to vector<2x128xf32>
    %175 = arith.mulf %171, %156 : vector<2x128xf32>
    %176 = arith.mulf %170, %173 : vector<2x128xf32>
    %177 = arith.addf %175, %176 : vector<2x128xf32>
    %178 = math.tanh %177 : vector<2x128xf32>
    %179 = arith.mulf %174, %178 : vector<2x128xf32>
    %c8 = arith.constant 8 : index
    %c0_25 = arith.constant 0 : index
    %180 = vector.load %arg3[%c8, %c0_25] : memref<184x512xf32, #tpu.memory_space<vmem>>, vector<128x32xf32>
    %c136 = arith.constant 136 : index
    %c0_26 = arith.constant 0 : index
    %181 = vector.load %arg3[%c136, %c0_26] : memref<184x512xf32, #tpu.memory_space<vmem>>, vector<1x32xf32>
    %c144 = arith.constant 144 : index
    %c0_27 = arith.constant 0 : index
    %182 = vector.load %arg3[%c144, %c0_27] : memref<184x512xf32, #tpu.memory_space<vmem>>, vector<32x128xf32>
    %c176 = arith.constant 176 : index
    %c0_28 = arith.constant 0 : index
    %183 = vector.load %arg3[%c176, %c0_28] : memref<184x512xf32, #tpu.memory_space<vmem>>, vector<1x128xf32>
    %cst_29 = arith.constant dense<0.000000e+00> : vector<2x32xf32>
    %184 = tpu.matmul %179, %180, %cst_29 {dimension_numbers = #tpu.dot_dimension_numbers<[1], [0], [0], [1], [0, 0, 1, 1], [], []>} : vector<2x128xf32>, vector<128x32xf32>, vector<2x32xf32> -> vector<2x32xf32>
    %185 = vector.broadcast %181 : vector<1x32xf32> to vector<2x32xf32>
    %186 = arith.addf %184, %185 : vector<2x32xf32>
    %cst_30 = arith.constant 0.000000e+00 : f32
    %187 = vector.broadcast %cst_30 : f32 to vector<2x32xf32>
    %188 = arith.maximumf %186, %187 : vector<2x32xf32>
    %189 = math.absf %186 : vector<2x32xf32>
    %cst_31 = arith.constant 0.000000e+00 : f32
    %190 = vector.broadcast %cst_31 : f32 to vector<2x32xf32>
    %191 = arith.subf %190, %189 : vector<2x32xf32>
    %192 = math.exp %191 : vector<2x32xf32>
    %193 = math.log1p %192 : vector<2x32xf32>
    %194 = arith.addf %188, %193 : vector<2x32xf32>
    %cst_32 = arith.constant dense<0.000000e+00> : vector<2x128xf32>
    %195 = tpu.matmul %194, %182, %cst_32 {dimension_numbers = #tpu.dot_dimension_numbers<[1], [0], [0], [1], [0, 0, 1, 1], [], []>} : vector<2x32xf32>, vector<32x128xf32>, vector<2x128xf32> -> vector<2x128xf32>
    %196 = vector.broadcast %183 : vector<1x128xf32> to vector<2x128xf32>
    %197 = arith.addf %195, %196 : vector<2x128xf32>
    %198 = tpu.iota {dimensions = array<i32: 1>} : vector<2x128xi32>
    %c16_i32 = arith.constant 16 : i32
    %199 = vector.broadcast %c16_i32 : i32 to vector<2x128xi32>
    %200 = arith.cmpi sge, %198, %199 : vector<2x128xi32>
    %c32_i32 = arith.constant 32 : i32
    %201 = vector.broadcast %c32_i32 : i32 to vector<2x128xi32>
    %202 = arith.cmpi slt, %198, %201 : vector<2x128xi32>
    %203 = arith.andi %200, %202 : vector<2x128xi1>
    %204 = math.exp %197 : vector<2x128xf32>
    %205 = arith.select %203, %204, %197 : vector<2x128xi1>, vector<2x128xf32>
    %c0_33 = arith.constant 0 : index
    %c0_34 = arith.constant 0 : index
    %206 = vector.load %arg4[%c0_33, %c0_34] : memref<2x128xf32, #tpu.memory_space<vmem>>, vector<2x128xf32>
    tpu.vector_store %arg4[%c0_33, %c0_34], %205 {strides = array<i32>} : memref<2x128xf32, #tpu.memory_space<vmem>>, vector<2x128xf32>,
    return
  }
}

</mosaic_0001>

<llo_original>
// kernel: vaencoder_forward.1
$region0: #{vaencoder_forward.1}
  #allocation0 [shape = 'u32[]', space=smem, size = 0x4, offset = 0x4, fixed_abs, tag = 'smem constant byte address 0x4 - core index']
  #allocation1 [shape = 'u32[144,128]{1,0:T(1,128)}', space=vmem, size = 0x12000, scoped, tag = 'internal scratch']
  %s0 = inlined_call_operand.vmem [shape: f32[16,4], index: 0, kind: input, shape index: {}]
  %s1 = inlined_call_operand.vmem [shape: bf16[4,1024], index: 1, kind: input, shape index: {}]
  %s2 = inlined_call_operand.vmem [shape: bf16[128,512], index: 2, kind: input, shape index: {}]
  %s3 = inlined_call_operand.vmem [shape: f32[184,512], index: 3, kind: input, shape index: {}]
  %s4 = inlined_call_operand.vmem [shape: f32[2,128], index: 4, kind: output, shape index: {}]
  %s5 = sld [smem:[#allocation0]]
  $region26: #{vaencoder_forward.1} parent=0
    _
  %s7 = ssub.s32 1, %s5
  %s8 = scalar_select 0, %s7, %s5
  // Predicated region
  $region2: #{vaencoder_forward.1} parent=0 // pred_check
    _
  $region3: #{vaencoder_forward.1} parent=0 // pred_check_branch
    %10 = sbr.rel (0) target = $region5
  $region4: #{vaencoder_forward.1} parent=0 // pred_region
    _
  $region5: #{vaencoder_forward.1} parent=0 // pred_fallthru
    _
  // Predicated region
  $region6: #{vaencoder_forward.1} parent=0 // pred_check
    _
  $region7: #{vaencoder_forward.1} parent=0 // pred_check_branch
    %12 = sbr.rel (0) target = $region9
  $region8: #{vaencoder_forward.1} parent=0 // pred_region
    _
  $region9: #{vaencoder_forward.1} parent=0 // pred_fallthru
    _
  // Predicated region
  $region10: #{vaencoder_forward.1} parent=0 // pred_check
    _
  $region11: #{vaencoder_forward.1} parent=0 // pred_check_branch
    %14 = sbr.rel (0) target = $region13
  $region12: #{vaencoder_forward.1} parent=0 // pred_region
    _
  $region13: #{vaencoder_forward.1} parent=0 // pred_fallthru
    _
  // Predicated region
  $region14: #{vaencoder_forward.1} parent=0 // pred_check
    _
  $region15: #{vaencoder_forward.1} parent=0 // pred_check_branch
    %16 = sbr.rel (0) target = $region17
  $region16: #{vaencoder_forward.1} parent=0 // pred_region
    _
  $region17: #{vaencoder_forward.1} parent=0 // pred_fallthru
    _
  %v18 = vld [vmem:[%s0] sm:$0xff]
  %v19 = vld [vmem:[%s0 + $0x8] sm:$0xff]
  %v20 = vpack.c.bf16 %v19, %v18
  %v21 = vld [vmem:[%s1] sm:$0xff]
  %v22 = vld [vmem:[%s1 + $0x8] sm:$0xff]
  %v25 = vcombine.high %v21, %v21
  %v27 = vunpack.c.l.s4 1983009808
  %v28 = vunpack.c.0.s8 %v27
  %v29 = vlaneseq
  %v30 = vshrl.u32 %v29, 7
  %v31 = vsub.s32 %v28, %v30
  %v32 = vrot.slane %v21, %v31
  %v34 = vunpack.c.l.s4 1983009808
  %v35 = vunpack.c.0.s8 %v34
  %v36 = vlaneseq
  %v37 = vshrl.u32 %v36, 7
  %v38 = vsub.s32 %v35, %v37
  %v39 = vrot.slane %v25, %v38
  %v40 = vcombine.high %v32, %v32
  %v41 = vcombine.high %v39, %v39
  %v42 = vcombine.high %v22, %v22
  %v44 = vunpack.c.l.s4 1983009808
  %v45 = vunpack.c.0.s8 %v44
  %v46 = vlaneseq
  %v47 = vshrl.u32 %v46, 7
  %v48 = vsub.s32 %v45, %v47
  %v49 = vrot.slane %v22, %v48
  %v51 = vunpack.c.l.s4 1983009808
  %v52 = vunpack.c.0.s8 %v51
  %v53 = vlaneseq
  %v54 = vshrl.u32 %v53, 7
  %v55 = vsub.s32 %v52, %v54
  %v56 = vrot.slane %v42, %v55
  %v57 = vcombine.high %v49, %v49
  %v58 = vcombine.high %v56, %v56
  %vm59 = vcmask 31744
  %v61 = vsel %vm59, %v20, 0
  %vm63 = vcmask 1041408
  %v65 = vsel %vm63, %v32, 0
  %v68 = vsel %vm63, %v40, 0
  %v71 = vsel %vm63, %v39, 0
  %v74 = vsel %vm63, %v41, 0
  %v77 = vsel %vm63, %v49, 0
  %v80 = vsel %vm63, %v57, 0
  %v83 = vsel %vm63, %v56, 0
  %v86 = vsel %vm63, %v58, 0
  %88 = vmatprep.subr.bf16.mxu0 %v68
  %89 = vmatpush1.bf16.msra.mxu0 %v65
  %90 = vmatprep.subr.bf16.mxu0 0
  %91 = vmatpush1.bf16.msra.mxu0 0
  %92 = vmatprep.subr.bf16.mxu0 0
  %93 = vmatpush1.bf16.msra.mxu0 0
  %94 = vmatprep.subr.bf16.mxu0 0
  %95 = vmatpush1.bf16.msra.mxu0 0
  %96 = vmatprep.subr.bf16.mxu0 0
  %97 = vmatpush1.bf16.msra.mxu0 0
  %98 = vmatprep.subr.bf16.mxu0 0
  %99 = vmatpush1.bf16.msra.mxu0 0
  %100 = vmatprep.subr.bf16.mxu0 0
  %101 = vmatpush1.bf16.msra.mxu0 0
  %102 = vmatprep.subr.bf16.mxu0 0
  %103 = vmatpush1.bf16.msra.mxu0 0
  %104 = vmatprep.subr.bf16.mxu0 0
  %105 = vmatpush1.bf16.msra.mxu0 0
  %106 = vmatprep.subr.bf16.mxu0 0
  %107 = vmatpush1.bf16.msra.mxu0 0
  %108 = vmatprep.subr.bf16.mxu0 0
  %109 = vmatpush1.bf16.msra.mxu0 0
  %110 = vmatprep.subr.bf16.mxu0 0
  %111 = vmatpush1.bf16.msra.mxu0 0
  %112 = vmatprep.subr.bf16.mxu0 0
  %113 = vmatpush1.bf16.msra.mxu0 0
  %114 = vmatprep.subr.bf16.mxu0 0
  %115 = vmatpush1.bf16.msra.mxu0 0
  %116 = vmatprep.subr.bf16.mxu0 0
  %117 = vmatpush1.bf16.msra.mxu0 0
  %118 = vmatprep.subr.bf16.mxu0 0
  %119 = vmatpush1.bf16.msra.mxu0 0
  %120 = vmatprep.mubr.bf16.mxu0 0
  %121 = vmatmul.mubr.bf16.gmra.mrb[0].mxu0 %v61
  %v122 = vpop.f32.mrb[0].mxu0
  %v123 = vadd.f32 0.0, %v122
  %v124 = vpop.f32.mrb[0].mxu0
  %v125 = vadd.f32 0.0, %v124
  %v126 = vpop.f32.mrb[0].mxu0
  %v127 = vadd.f32 0.0, %v126
  %v128 = vpop.f32.mrb[0].mxu0
  %v129 = vadd.f32 0.0, %v128
  %130 = vdwg.mxu0
  %131 = vmatprep.subr.bf16.mxu0 %v74
  %132 = vmatpush1.bf16.msra.mxu0 %v71
  %133 = vmatprep.subr.bf16.mxu0 0
  %134 = vmatpush1.bf16.msra.mxu0 0
  %135 = vmatprep.subr.bf16.mxu0 0
  %136 = vmatpush1.bf16.msra.mxu0 0
  %137 = vmatprep.subr.bf16.mxu0 0
  %138 = vmatpush1.bf16.msra.mxu0 0
  %139 = vmatprep.subr.bf16.mxu0 0
  %140 = vmatpush1.bf16.msra.mxu0 0
  %141 = vmatprep.subr.bf16.mxu0 0
  %142 = vmatpush1.bf16.msra.mxu0 0
  %143 = vmatprep.subr.bf16.mxu0 0
  %144 = vmatpush1.bf16.msra.mxu0 0
  %145 = vmatprep.subr.bf16.mxu0 0
  %146 = vmatpush1.bf16.msra.mxu0 0
  %147 = vmatprep.subr.bf16.mxu0 0
  %148 = vmatpush1.bf16.msra.mxu0 0
  %149 = vmatprep.subr.bf16.mxu0 0
  %150 = vmatpush1.bf16.msra.mxu0 0
  %151 = vmatprep.subr.bf16.mxu0 0
  %152 = vmatpush1.bf16.msra.mxu0 0
  %153 = vmatprep.subr.bf16.mxu0 0
  %154 = vmatpush1.bf16.msra.mxu0 0
  %155 = vmatprep.subr.bf16.mxu0 0
  %156 = vmatpush1.bf16.msra.mxu0 0
  %157 = vmatprep.subr.bf16.mxu0 0
  %158 = vmatpush1.bf16.msra.mxu0 0
  %159 = vmatprep.subr.bf16.mxu0 0
  %160 = vmatpush1.bf16.msra.mxu0 0
  %161 = vmatprep.subr.bf16.mxu0 0
  %162 = vmatpush1.bf16.msra.mxu0 0
  %163 = vmatprep.mubr.bf16.mxu0 0
  %164 = vmatmul.mubr.bf16.gmra.mrb[0].mxu0 %v61
  %v165 = vpop.f32.mrb[0].mxu0
  %v166 = vadd.f32 0.0, %v165
  %v167 = vpop.f32.mrb[0].mxu0
  %v168 = vadd.f32 0.0, %v167
  %v169 = vpop.f32.mrb[0].mxu0
  %v170 = vadd.f32 0.0, %v169
  %v171 = vpop.f32.mrb[0].mxu0
  %v172 = vadd.f32 0.0, %v171
  %173 = vdwg.mxu0
  %174 = vmatprep.subr.bf16.mxu0 %v80
  %175 = vmatpush1.bf16.msra.mxu0 %v77
  %176 = vmatprep.subr.bf16.mxu0 0
  %177 = vmatpush1.bf16.msra.mxu0 0
  %178 = vmatprep.subr.bf16.mxu0 0
  %179 = vmatpush1.bf16.msra.mxu0 0
  %180 = vmatprep.subr.bf16.mxu0 0
  %181 = vmatpush1.bf16.msra.mxu0 0
  %182 = vmatprep.subr.bf16.mxu0 0
  %183 = vmatpush1.bf16.msra.mxu0 0
  %184 = vmatprep.subr.bf16.mxu0 0
  %185 = vmatpush1.bf16.msra.mxu0 0
  %186 = vmatprep.subr.bf16.mxu0 0
  %187 = vmatpush1.bf16.msra.mxu0 0
  %188 = vmatprep.subr.bf16.mxu0 0
  %189 = vmatpush1.bf16.msra.mxu0 0
  %190 = vmatprep.subr.bf16.mxu0 0
  %191 = vmatpush1.bf16.msra.mxu0 0
  %192 = vmatprep.subr.bf16.mxu0 0
  %193 = vmatpush1.bf16.msra.mxu0 0
  %194 = vmatprep.subr.bf16.mxu0 0
  %195 = vmatpush1.bf16.msra.mxu0 0
  %196 = vmatprep.subr.bf16.mxu0 0
  %197 = vmatpush1.bf16.msra.mxu0 0
  %198 = vmatprep.subr.bf16.mxu0 0
  %199 = vmatpush1.bf16.msra.mxu0 0
  %200 = vmatprep.subr.bf16.mxu0 0
  %201 = vmatpush1.bf16.msra.mxu0 0
  %202 = vmatprep.subr.bf16.mxu0 0
  %203 = vmatpush1.bf16.msra.mxu0 0
  %204 = vmatprep.subr.bf16.mxu0 0
  %205 = vmatpush1.bf16.msra.mxu0 0
  %206 = vmatprep.mubr.bf16.mxu0 0
  %207 = vmatmul.mubr.bf16.gmra.mrb[0].mxu0 %v61
  %v208 = vpop.f32.mrb[0].mxu0
  %v209 = vadd.f32 0.0, %v208
  %v210 = vpop.f32.mrb[0].mxu0
  %v211 = vadd.f32 0.0, %v210
  %v212 = vpop.f32.mrb[0].mxu0
  %v213 = vadd.f32 0.0, %v212
  %v214 = vpop.f32.mrb[0].mxu0
  %v215 = vadd.f32 0.0, %v214
  %216 = vdwg.mxu0
  %217 = vmatprep.subr.bf16.mxu0 %v86
  %218 = vmatpush1.bf16.msra.mxu0 %v83
  %219 = vmatprep.subr.bf16.mxu0 0
  %220 = vmatpush1.bf16.msra.mxu0 0
  %221 = vmatprep.subr.bf16.mxu0 0
  %222 = vmatpush1.bf16.msra.mxu0 0
  %223 = vmatprep.subr.bf16.mxu0 0
  %224 = vmatpush1.bf16.msra.mxu0 0
  %225 = vmatprep.subr.bf16.mxu0 0
  %226 = vmatpush1.bf16.msra.mxu0 0
  %227 = vmatprep.subr.bf16.mxu0 0
  %228 = vmatpush1.bf16.msra.mxu0 0
  %229 = vmatprep.subr.bf16.mxu0 0
  %230 = vmatpush1.bf16.msra.mxu0 0
  %231 = vmatprep.subr.bf16.mxu0 0
  %232 = vmatpush1.bf16.msra.mxu0 0
  %233 = vmatprep.subr.bf16.mxu0 0
  %234 = vmatpush1.bf16.msra.mxu0 0
  %235 = vmatprep.subr.bf16.mxu0 0
  %236 = vmatpush1.bf16.msra.mxu0 0
  %237 = vmatprep.subr.bf16.mxu0 0
  %238 = vmatpush1.bf16.msra.mxu0 0
  %239 = vmatprep.subr.bf16.mxu0 0
  %240 = vmatpush1.bf16.msra.mxu0 0
  %241 = vmatprep.subr.bf16.mxu0 0
  %242 = vmatpush1.bf16.msra.mxu0 0
  %243 = vmatprep.subr.bf16.mxu0 0
  %244 = vmatpush1.bf16.msra.mxu0 0
  %245 = vmatprep.subr.bf16.mxu0 0
  %246 = vmatpush1.bf16.msra.mxu0 0
  %247 = vmatprep.subr.bf16.mxu0 0
  %248 = vmatpush1.bf16.msra.mxu0 0
  %249 = vmatprep.mubr.bf16.mxu0 0
  %250 = vmatmul.mubr.bf16.gmra.mrb[0].mxu0 %v61
  %v251 = vpop.f32.mrb[0].mxu0
  %v252 = vadd.f32 0.0, %v251
  %v253 = vpop.f32.mrb[0].mxu0
  %v254 = vadd.f32 0.0, %v253
  %v255 = vpop.f32.mrb[0].mxu0
  %v256 = vadd.f32 0.0, %v255
  %v257 = vpop.f32.mrb[0].mxu0
  %v258 = vadd.f32 0.0, %v257
  %259 = vdwg.mxu0
  %v260 = vld [vmem:[%s3] ss:$8 sm:$0xf]
  %v262 = vlaneseq
  %v263 = vshrl.u32 %v262, 7
  %v264 = vsub.s32 0, %v263
  %v265 = vrot.slane %v260, %v264
  %v266 = vlaneseq
  %v267 = vshrl.u32 %v266, 7
  %v268 = vsub.s32 1, %v267
  %v269 = vrot.slane %v260, %v268
  %v270 = vlaneseq
  %v271 = vshrl.u32 %v270, 7
  %v272 = vsub.s32 2, %v271
  %v273 = vrot.slane %v260, %v272
  %v274 = vlaneseq
  %v275 = vshrl.u32 %v274, 7
  %v276 = vsub.s32 3, %v275
  %v277 = vrot.slane %v260, %v276
  %v282 = vadd.f32 %v123, %v265
  %v283 = vadd.f32 %v125, %v269
  %v284 = vadd.f32 %v166, %v273
  %v285 = vadd.f32 %v168, %v277
  %v286 = vadd.f32 %v127, %v265
  %v287 = vadd.f32 %v129, %v269
  %v288 = vadd.f32 %v170, %v273
  %v289 = vadd.f32 %v172, %v277
  %v290 = vld [vmem:[%s2] sm:$0xff]
  %v291 = vld [vmem:[%s2 + $0x8] sm:$0xff]
  %v292 = vld [vmem:[%s2 + $0x10] sm:$0xff]
  %v293 = vld [vmem:[%s2 + $0x18] sm:$0xff]
  %v294 = vld [vmem:[%s2 + $0x20] sm:$0xff]
  %v295 = vld [vmem:[%s2 + $0x28] sm:$0xff]
  %v296 = vld [vmem:[%s2 + $0x30] sm:$0xff]
  %v297 = vld [vmem:[%s2 + $0x38] sm:$0xff]
  %v298 = vld [vmem:[%s2 + $0x40] sm:$0xff]
  %v299 = vld [vmem:[%s2 + $0x48] sm:$0xff]
  %v300 = vld [vmem:[%s2 + $0x50] sm:$0xff]
  %v301 = vld [vmem:[%s2 + $0x58] sm:$0xff]
  %v302 = vld [vmem:[%s2 + $0x60] sm:$0xff]
  %v303 = vld [vmem:[%s2 + $0x68] sm:$0xff]
  %v304 = vld [vmem:[%s2 + $0x70] sm:$0xff]
  %v305 = vld [vmem:[%s2 + $0x78] sm:$0xff]
  %v306 = vld [vmem:[%s2 + $0x80] sm:$0xff]
  %v307 = vld [vmem:[%s2 + $0x88] sm:$0xff]
  %v308 = vld [vmem:[%s2 + $0x90] sm:$0xff]
  %v309 = vld [vmem:[%s2 + $0x98] sm:$0xff]
  %v310 = vld [vmem:[%s2 + $0xa0] sm:$0xff]
  %v311 = vld [vmem:[%s2 + $0xa8] sm:$0xff]
  %v312 = vld [vmem:[%s2 + $0xb0] sm:$0xff]
  %v313 = vld [vmem:[%s2 + $0xb8] sm:$0xff]
  %v314 = vld [vmem:[%s2 + $0xc0] sm:$0xff]
  %v315 = vld [vmem:[%s2 + $0xc8] sm:$0xff]
  %v316 = vld [vmem:[%s2 + $0xd0] sm:$0xff]
  %v317 = vld [vmem:[%s2 + $0xd8] sm:$0xff]
  %v318 = vld [vmem:[%s2 + $0xe0] sm:$0xff]
  %v319 = vld [vmem:[%s2 + $0xe8] sm:$0xff]
  %v320 = vld [vmem:[%s2 + $0xf0] sm:$0xff]
  %v321 = vld [vmem:[%s2 + $0xf8] sm:$0xff]
  %v326 = vrot.slane %v213, 6
  %v327 = vrot.slane %v215, 6
  %v328 = vrot.slane %v256, 6
  %v329 = vrot.slane %v258, 6
  %v334 = vadd.f32 %v282, %v326
  %v335 = vadd.f32 %v283, %v327
  %v336 = vadd.f32 %v284, %v328
  %v337 = vadd.f32 %v285, %v329
  %v370 = vunpack.c.l.b16 %v290
  %v371 = vunpack.c.h.b16 %v290
  %v372 = vunpack.c.l.b16 %v291
  %v373 = vunpack.c.h.b16 %v291
  %v374 = vunpack.c.l.b16 %v292
  %v375 = vunpack.c.h.b16 %v292
  %v376 = vunpack.c.l.b16 %v293
  %v377 = vunpack.c.h.b16 %v293
  %v378 = vunpack.c.l.b16 %v294
  %v379 = vunpack.c.h.b16 %v294
  %v380 = vunpack.c.l.b16 %v295
  %v381 = vunpack.c.h.b16 %v295
  %v382 = vunpack.c.l.b16 %v296
  %v383 = vunpack.c.h.b16 %v296
  %v384 = vunpack.c.l.b16 %v297
  %v385 = vunpack.c.h.b16 %v297
  %v386 = vunpack.c.l.b16 %v298
  %v387 = vunpack.c.h.b16 %v298
  %v388 = vunpack.c.l.b16 %v299
  %v389 = vunpack.c.h.b16 %v299
  %v390 = vunpack.c.l.b16 %v300
  %v391 = vunpack.c.h.b16 %v300
  %v392 = vunpack.c.l.b16 %v301
  %v393 = vunpack.c.h.b16 %v301
  %v394 = vunpack.c.l.b16 %v302
  %v395 = vunpack.c.h.b16 %v302
  %v396 = vunpack.c.l.b16 %v303
  %v397 = vunpack.c.h.b16 %v303
  %v398 = vunpack.c.l.b16 %v304
  %v399 = vunpack.c.h.b16 %v304
  %v400 = vunpack.c.l.b16 %v305
  %v401 = vunpack.c.h.b16 %v305
  %v402 = vunpack.c.l.b16 %v306
  %v403 = vunpack.c.h.b16 %v306
  %v404 = vunpack.c.l.b16 %v307
  %v405 = vunpack.c.h.b16 %v307
  %v406 = vunpack.c.l.b16 %v308
  %v407 = vunpack.c.h.b16 %v308
  %v408 = vunpack.c.l.b16 %v309
  %v409 = vunpack.c.h.b16 %v309
  %v410 = vunpack.c.l.b16 %v310
  %v411 = vunpack.c.h.b16 %v310
  %v412 = vunpack.c.l.b16 %v311
  %v413 = vunpack.c.h.b16 %v311
  %v414 = vunpack.c.l.b16 %v312
  %v415 = vunpack.c.h.b16 %v312
  %v416 = vunpack.c.l.b16 %v313
  %v417 = vunpack.c.h.b16 %v313
  %v418 = vunpack.c.l.b16 %v314
  %v419 = vunpack.c.h.b16 %v314
  %v420 = vunpack.c.l.b16 %v315
  %v421 = vunpack.c.h.b16 %v315
  %v422 = vunpack.c.l.b16 %v316
  %v423 = vunpack.c.h.b16 %v316
  %v424 = vunpack.c.l.b16 %v317
  %v425 = vunpack.c.h.b16 %v317
  %v426 = vunpack.c.l.b16 %v318
  %v427 = vunpack.c.h.b16 %v318
  %v428 = vunpack.c.l.b16 %v319
  %v429 = vunpack.c.h.b16 %v319
  %v430 = vunpack.c.l.b16 %v320
  %v431 = vunpack.c.h.b16 %v320
  %v432 = vunpack.c.l.b16 %v321
  %v433 = vunpack.c.h.b16 %v321
  %v434 = vpack.c.b16 %v374, %v370
  %v435 = vpack.c.b16 %v375, %v371
  %v436 = vpack.c.b16 %v376, %v372
  %v437 = vpack.c.b16 %v377, %v373
  %v438 = vpack.c.b16 %v382, %v378
  %v439 = vpack.c.b16 %v383, %v379
  %v440 = vpack.c.b16 %v384, %v380
  %v441 = vpack.c.b16 %v385, %v381
  %v442 = vpack.c.b16 %v390, %v386
  %v443 = vpack.c.b16 %v391, %v387
  %v444 = vpack.c.b16 %v392, %v388
  %v445 = vpack.c.b16 %v393, %v389
  %v446 = vpack.c.b16 %v398, %v394
  %v447 = vpack.c.b16 %v399, %v395
  %v448 = vpack.c.b16 %v400, %v396
  %v449 = vpack.c.b16 %v401, %v397
  %v450 = vpack.c.b16 %v406, %v402
  %v451 = vpack.c.b16 %v407, %v403
  %v452 = vpack.c.b16 %v408, %v404
  %v453 = vpack.c.b16 %v409, %v405
  %v454 = vpack.c.b16 %v414, %v410
  %v455 = vpack.c.b16 %v415, %v411
  %v456 = vpack.c.b16 %v416, %v412
  %v457 = vpack.c.b16 %v417, %v413
  %v458 = vpack.c.b16 %v422, %v418
  %v459 = vpack.c.b16 %v423, %v419
  %v460 = vpack.c.b16 %v424, %v420
  %v461 = vpack.c.b16 %v425, %v421
  %v462 = vpack.c.b16 %v430, %v426
  %v463 = vpack.c.b16 %v431, %v427
  %v464 = vpack.c.b16 %v432, %v428
  %v465 = vpack.c.b16 %v433, %v429
  %498 = vmatprep.subr.bf16.mxu0 %v435
  %499 = vmatpush1.bf16.msra.mxu0 %v434
  %500 = vmatprep.subr.bf16.mxu0 %v439
  %501 = vmatpush1.bf16.msra.mxu0 %v438
  %502 = vmatprep.subr.bf16.mxu0 %v443
  %503 = vmatpush1.bf16.msra.mxu0 %v442
  %504 = vmatprep.subr.bf16.mxu0 %v447
  %505 = vmatpush1.bf16.msra.mxu0 %v446
  %506 = vmatprep.subr.bf16.mxu0 %v451
  %507 = vmatpush1.bf16.msra.mxu0 %v450
  %508 = vmatprep.subr.bf16.mxu0 %v455
  %509 = vmatpush1.bf16.msra.mxu0 %v454
  %510 = vmatprep.subr.bf16.mxu0 %v459
  %511 = vmatpush1.bf16.msra.mxu0 %v458
  %512 = vmatprep.subr.bf16.mxu0 %v463
  %513 = vmatpush1.bf16.msra.mxu0 %v462
  %514 = vmatprep.subr.bf16.mxu0 0
  %515 = vmatpush1.bf16.msra.mxu0 0
  %516 = vmatprep.subr.bf16.mxu0 0
  %517 = vmatpush1.bf16.msra.mxu0 0
  %518 = vmatprep.subr.bf16.mxu0 0
  %519 = vmatpush1.bf16.msra.mxu0 0
  %520 = vmatprep.subr.bf16.mxu0 0
  %521 = vmatpush1.bf16.msra.mxu0 0
  %522 = vmatprep.subr.bf16.mxu0 0
  %523 = vmatpush1.bf16.msra.mxu0 0
  %524 = vmatprep.subr.bf16.mxu0 0
  %525 = vmatpush1.bf16.msra.mxu0 0
  %526 = vmatprep.subr.bf16.mxu0 0
  %527 = vmatpush1.bf16.msra.mxu0 0
  %528 = vmatprep.subr.bf16.mxu0 0
  %529 = vmatpush1.bf16.msra.mxu0 0
  %530 = vmatprep.mubr.bf16.mxu0 0
  %531 = vmatmul.mubr.bf16.gmra.mrb[0].mxu0 0
  %v532 = vpop.f32.mrb[0].mxu0
  %v533 = vadd.f32 0.0, %v532
  %v534 = vpop.f32.mrb[0].mxu0
  %v535 = vadd.f32 0.0, %v534
  %v536 = vpop.f32.mrb[0].mxu0
  %v537 = vpop.f32.mrb[0].mxu0
  %538 = vdwg.mxu0
  %539 = vmatprep.subr.bf16.mxu0 %v437
  %540 = vmatpush1.bf16.msra.mxu0 %v436
  %541 = vmatprep.subr.bf16.mxu0 %v441
  %542 = vmatpush1.bf16.msra.mxu0 %v440
  %543 = vmatprep.subr.bf16.mxu0 %v445
  %544 = vmatpush1.bf16.msra.mxu0 %v444
  %545 = vmatprep.subr.bf16.mxu0 %v449
  %546 = vmatpush1.bf16.msra.mxu0 %v448
  %547 = vmatprep.subr.bf16.mxu0 %v453
  %548 = vmatpush1.bf16.msra.mxu0 %v452
  %549 = vmatprep.subr.bf16.mxu0 %v457
  %550 = vmatpush1.bf16.msra.mxu0 %v456
  %551 = vmatprep.subr.bf16.mxu0 %v461
  %552 = vmatpush1.bf16.msra.mxu0 %v460
  %553 = vmatprep.subr.bf16.mxu0 %v465
  %554 = vmatpush1.bf16.msra.mxu0 %v464
  %555 = vmatprep.subr.bf16.mxu0 0
  %556 = vmatpush1.bf16.msra.mxu0 0
  %557 = vmatprep.subr.bf16.mxu0 0
  %558 = vmatpush1.bf16.msra.mxu0 0
  %559 = vmatprep.subr.bf16.mxu0 0
  %560 = vmatpush1.bf16.msra.mxu0 0
  %561 = vmatprep.subr.bf16.mxu0 0
  %562 = vmatpush1.bf16.msra.mxu0 0
  %563 = vmatprep.subr.bf16.mxu0 0
  %564 = vmatpush1.bf16.msra.mxu0 0
  %565 = vmatprep.subr.bf16.mxu0 0
  %566 = vmatpush1.bf16.msra.mxu0 0
  %567 = vmatprep.subr.bf16.mxu0 0
  %568 = vmatpush1.bf16.msra.mxu0 0
  %569 = vmatprep.subr.bf16.mxu0 0
  %570 = vmatpush1.bf16.msra.mxu0 0
  %571 = vmatprep.mubr.bf16.mxu0 0
  %572 = vmatmul.mubr.bf16.gmra.mrb[0].mxu0 0
  %v573 = vpop.f32.mrb[0].mxu0
  %v574 = vadd.f32 0.0, %v573
  %v575 = vpop.f32.mrb[0].mxu0
  %v576 = vadd.f32 0.0, %v575
  %v577 = vpop.f32.mrb[0].mxu0
  %v578 = vpop.f32.mrb[0].mxu0
  %579 = vdwg.mxu0
  %v580 = vadd.f32 %v334, %v533
  %v581 = vadd.f32 %v335, %v535
  %v582 = vadd.f32 %v336, %v574
  %v583 = vadd.f32 %v337, %v576
  %v584 = vxor.u32 %v580, 2147483648
  %v585 = vxor.u32 %v581, 2147483648
  %v586 = vxor.u32 %v583, 2147483648
  %v587 = vmul.f32 %v584, 1.442695
  %v588 = vpow.pop %v587
  %v589 = vmul.f32 %v585, 1.442695
  %v590 = vpow.pop %v589
  %v591 = vmul.f32 %v586, 1.442695
  %v592 = vpow.pop %v591
  %v593 = vadd.f32 %v588, 1.0
  %v594 = vadd.f32 %v590, 1.0
  %v595 = vadd.f32 %v592, 1.0
  %v596 = vrcp.pop %v593
  %v597 = vmul.f32 1.0, %v596
  %v598 = vrcp.pop %v594
  %v599 = vmul.f32 1.0, %v598
  %v600 = vrcp.pop %v595
  %v601 = vmul.f32 1.0, %v600
  %v602 = vtanh.pop %v582
  %v603 = vmul.f32 %v599, 0.0
  %v604 = vmul.f32 %v597, %v602
  %v605 = vadd.f32 %v603, %v604
  %v606 = vtanh.pop %v605
  %v607 = vmul.f32 %v601, %v606
  %v608 = vrot.slane %v213, 2
  %v609 = vrot.slane %v215, 2
  %v610 = vrot.slane %v256, 2
  %v611 = vrot.slane %v258, 2
  %v616 = vadd.f32 %v282, %v608
  %v617 = vadd.f32 %v283, %v609
  %v618 = vadd.f32 %v284, %v610
  %v619 = vadd.f32 %v285, %v611
  %v620 = vpack.c.bf16 %v607, %v607
  %621 = vmatprep.subr.bf16.mxu0 %v435
  %622 = vmatpush1.bf16.msra.mxu0 %v434
  %623 = vmatprep.subr.bf16.mxu0 %v439
  %624 = vmatpush1.bf16.msra.mxu0 %v438
  %625 = vmatprep.subr.bf16.mxu0 %v443
  %626 = vmatpush1.bf16.msra.mxu0 %v442
  %627 = vmatprep.subr.bf16.mxu0 %v447
  %628 = vmatpush1.bf16.msra.mxu0 %v446
  %629 = vmatprep.subr.bf16.mxu0 %v451
  %630 = vmatpush1.bf16.msra.mxu0 %v450
  %631 = vmatprep.subr.bf16.mxu0 %v455
  %632 = vmatpush1.bf16.msra.mxu0 %v454
  %633 = vmatprep.subr.bf16.mxu0 %v459
  %634 = vmatpush1.bf16.msra.mxu0 %v458
  %635 = vmatprep.subr.bf16.mxu0 %v463
  %636 = vmatpush1.bf16.msra.mxu0 %v462
  %637 = vmatprep.subr.bf16.mxu0 0
  %638 = vmatpush1.bf16.msra.mxu0 0
  %639 = vmatprep.subr.bf16.mxu0 0
  %640 = vmatpush1.bf16.msra.mxu0 0
  %641 = vmatprep.subr.bf16.mxu0 0
  %642 = vmatpush1.bf16.msra.mxu0 0
  %643 = vmatprep.subr.bf16.mxu0 0
  %644 = vmatpush1.bf16.msra.mxu0 0
  %645 = vmatprep.subr.bf16.mxu0 0
  %646 = vmatpush1.bf16.msra.mxu0 0
  %647 = vmatprep.subr.bf16.mxu0 0
  %648 = vmatpush1.bf16.msra.mxu0 0
  %649 = vmatprep.subr.bf16.mxu0 0
  %650 = vmatpush1.bf16.msra.mxu0 0
  %651 = vmatprep.subr.bf16.mxu0 0
  %652 = vmatpush1.bf16.msra.mxu0 0
  %653 = vmatprep.mubr.bf16.mxu0 0
  %654 = vmatmul.mubr.bf16.gmra.mrb[0].mxu0 %v620
  %v655 = vpop.f32.mrb[0].mxu0
  %v656 = vadd.f32 0.0, %v655
  %v657 = vpop.f32.mrb[0].mxu0
  %v658 = vadd.f32 0.0, %v657
  %v659 = vpop.f32.mrb[0].mxu0
  %v660 = vpop.f32.mrb[0].mxu0
  %661 = vdwg.mxu0
  %662 = vmatprep.subr.bf16.mxu0 %v437
  %663 = vmatpush1.bf16.msra.mxu0 %v436
  %664 = vmatprep.subr.bf16.mxu0 %v441
  %665 = vmatpush1.bf16.msra.mxu0 %v440
  %666 = vmatprep.subr.bf16.mxu0 %v445
  %667 = vmatpush1.bf16.msra.mxu0 %v444
  %668 = vmatprep.subr.bf16.mxu0 %v449
  %669 = vmatpush1.bf16.msra.mxu0 %v448
  %670 = vmatprep.subr.bf16.mxu0 %v453
  %671 = vmatpush1.bf16.msra.mxu0 %v452
  %672 = vmatprep.subr.bf16.mxu0 %v457
  %673 = vmatpush1.bf16.msra.mxu0 %v456
  %674 = vmatprep.subr.bf16.mxu0 %v461
  %675 = vmatpush1.bf16.msra.mxu0 %v460
  %676 = vmatprep.subr.bf16.mxu0 %v465
  %677 = vmatpush1.bf16.msra.mxu0 %v464
  %678 = vmatprep.subr.bf16.mxu0 0
  %679 = vmatpush1.bf16.msra.mxu0 0
  %680 = vmatprep.subr.bf16.mxu0 0
  %681 = vmatpush1.bf16.msra.mxu0 0
  %682 = vmatprep.subr.bf16.mxu0 0
  %683 = vmatpush1.bf16.msra.mxu0 0
  %684 = vmatprep.subr.bf16.mxu0 0
  %685 = vmatpush1.bf16.msra.mxu0 0
  %686 = vmatprep.subr.bf16.mxu0 0
  %687 = vmatpush1.bf16.msra.mxu0 0
  %688 = vmatprep.subr.bf16.mxu0 0
  %689 = vmatpush1.bf16.msra.mxu0 0
  %690 = vmatprep.subr.bf16.mxu0 0
  %691 = vmatpush1.bf16.msra.mxu0 0
  %692 = vmatprep.subr.bf16.mxu0 0
  %693 = vmatpush1.bf16.msra.mxu0 0
  %694 = vmatprep.mubr.bf16.mxu0 0
  %695 = vmatmul.mubr.bf16.gmra.mrb[0].mxu0 %v620
  %v696 = vpop.f32.mrb[0].mxu0
  %v697 = vadd.f32 0.0, %v696
  %v698 = vpop.f32.mrb[0].mxu0
  %v699 = vadd.f32 0.0, %v698
  %v700 = vpop.f32.mrb[0].mxu0
  %v701 = vpop.f32.mrb[0].mxu0
  %702 = vdwg.mxu0
  %v707 = vrot.slane %v656, 6
  %v708 = vrot.slane %v658, 6
  %v709 = vrot.slane %v697, 6
  %v710 = vrot.slane %v699, 6
  %v715 = vadd.f32 %v616, %v707
  %v716 = vadd.f32 %v617, %v708
  %v717 = vadd.f32 %v618, %v709
  %v718 = vadd.f32 %v619, %v710
  %v719 = vxor.u32 %v715, 2147483648
  %v720 = vxor.u32 %v716, 2147483648
  %v721 = vxor.u32 %v718, 2147483648
  %v722 = vmul.f32 %v719, 1.442695
  %v723 = vpow.pop %v722
  %v724 = vmul.f32 %v720, 1.442695
  %v725 = vpow.pop %v724
  %v726 = vmul.f32 %v721, 1.442695
  %v727 = vpow.pop %v726
  %v728 = vadd.f32 %v723, 1.0
  %v729 = vadd.f32 %v725, 1.0
  %v730 = vadd.f32 %v727, 1.0
  %v731 = vrcp.pop %v728
  %v732 = vmul.f32 1.0, %v731
  %v733 = vrcp.pop %v729
  %v734 = vmul.f32 1.0, %v733
  %v735 = vrcp.pop %v730
  %v736 = vmul.f32 1.0, %v735
  %v737 = vtanh.pop %v717
  %v739 = vrot.slane %v605, 6
  %v741 = vmul.f32 %v734, %v739
  %v742 = vmul.f32 %v732, %v737
  %v743 = vadd.f32 %v741, %v742
  %v744 = vtanh.pop %v743
  %v745 = vmul.f32 %v736, %v744
  %v746 = vpack.c.bf16 %v745, %v745
  %v748 = vrot.slane %v746, 1
  %750 = vmatprep.subr.bf16.mxu0 %v435
  %751 = vmatpush1.bf16.msra.mxu0 %v434
  %752 = vmatprep.subr.bf16.mxu0 %v439
  %753 = vmatpush1.bf16.msra.mxu0 %v438
  %754 = vmatprep.subr.bf16.mxu0 %v443
  %755 = vmatpush1.bf16.msra.mxu0 %v442
  %756 = vmatprep.subr.bf16.mxu0 %v447
  %757 = vmatpush1.bf16.msra.mxu0 %v446
  %758 = vmatprep.subr.bf16.mxu0 %v451
  %759 = vmatpush1.bf16.msra.mxu0 %v450
  %760 = vmatprep.subr.bf16.mxu0 %v455
  %761 = vmatpush1.bf16.msra.mxu0 %v454
  %762 = vmatprep.subr.bf16.mxu0 %v459
  %763 = vmatpush1.bf16.msra.mxu0 %v458
  %764 = vmatprep.subr.bf16.mxu0 %v463
  %765 = vmatpush1.bf16.msra.mxu0 %v462
  %766 = vmatprep.subr.bf16.mxu0 0
  %767 = vmatpush1.bf16.msra.mxu0 0
  %768 = vmatprep.subr.bf16.mxu0 0
  %769 = vmatpush1.bf16.msra.mxu0 0
  %770 = vmatprep.subr.bf16.mxu0 0
  %771 = vmatpush1.bf16.msra.mxu0 0
  %772 = vmatprep.subr.bf16.mxu0 0
  %773 = vmatpush1.bf16.msra.mxu0 0
  %774 = vmatprep.subr.bf16.mxu0 0
  %775 = vmatpush1.bf16.msra.mxu0 0
  %776 = vmatprep.subr.bf16.mxu0 0
  %777 = vmatpush1.bf16.msra.mxu0 0
  %778 = vmatprep.subr.bf16.mxu0 0
  %779 = vmatpush1.bf16.msra.mxu0 0
  %780 = vmatprep.subr.bf16.mxu0 0
  %781 = vmatpush1.bf16.msra.mxu0 0
  %782 = vmatprep.mubr.bf16.mxu0 0
  %783 = vmatmul.mubr.bf16.gmra.mrb[0].mxu0 %v748
  %v784 = vpop.f32.mrb[0].mxu0
  %v785 = vadd.f32 0.0, %v784
  %v786 = vpop.f32.mrb[0].mxu0
  %v787 = vadd.f32 0.0, %v786
  %v788 = vpop.f32.mrb[0].mxu0
  %v789 = vpop.f32.mrb[0].mxu0
  %790 = vdwg.mxu0
  %791 = vmatprep.subr.bf16.mxu0 %v437
  %792 = vmatpush1.bf16.msra.mxu0 %v436
  %793 = vmatprep.subr.bf16.mxu0 %v441
  %794 = vmatpush1.bf16.msra.mxu0 %v440
  %795 = vmatprep.subr.bf16.mxu0 %v445
  %796 = vmatpush1.bf16.msra.mxu0 %v444
  %797 = vmatprep.subr.bf16.mxu0 %v449
  %798 = vmatpush1.bf16.msra.mxu0 %v448
  %799 = vmatprep.subr.bf16.mxu0 %v453
  %800 = vmatpush1.bf16.msra.mxu0 %v452
  %801 = vmatprep.subr.bf16.mxu0 %v457
  %802 = vmatpush1.bf16.msra.mxu0 %v456
  %803 = vmatprep.subr.bf16.mxu0 %v461
  %804 = vmatpush1.bf16.msra.mxu0 %v460
  %805 = vmatprep.subr.bf16.mxu0 %v465
  %806 = vmatpush1.bf16.msra.mxu0 %v464
  %807 = vmatprep.subr.bf16.mxu0 0
  %808 = vmatpush1.bf16.msra.mxu0 0
  %809 = vmatprep.subr.bf16.mxu0 0
  %810 = vmatpush1.bf16.msra.mxu0 0
  %811 = vmatprep.subr.bf16.mxu0 0
  %812 = vmatpush1.bf16.msra.mxu0 0
  %813 = vmatprep.subr.bf16.mxu0 0
  %814 = vmatpush1.bf16.msra.mxu0 0
  %815 = vmatprep.subr.bf16.mxu0 0
  %816 = vmatpush1.bf16.msra.mxu0 0
  %817 = vmatprep.subr.bf16.mxu0 0
  %818 = vmatpush1.bf16.msra.mxu0 0
  %819 = vmatprep.subr.bf16.mxu0 0
  %820 = vmatpush1.bf16.msra.mxu0 0
  %821 = vmatprep.subr.bf16.mxu0 0
  %822 = vmatpush1.bf16.msra.mxu0 0
  %823 = vmatprep.mubr.bf16.mxu0 0
  %824 = vmatmul.mubr.bf16.gmra.mrb[0].mxu0 %v748
  %v825 = vpop.f32.mrb[0].mxu0
  %v826 = vadd.f32 0.0, %v825
  %v827 = vpop.f32.mrb[0].mxu0
  %v828 = vadd.f32 0.0, %v827
  %v829 = vpop.f32.mrb[0].mxu0
  %v830 = vpop.f32.mrb[0].mxu0
  %831 = vdwg.mxu0
  %v836 = vrot.slane %v785, 4
  %v837 = vrot.slane %v787, 4
  %v838 = vrot.slane %v826, 4
  %v839 = vrot.slane %v828, 4
  %v844 = vadd.f32 %v334, %v836
  %v845 = vadd.f32 %v335, %v837
  %v846 = vadd.f32 %v336, %v838
  %v847 = vadd.f32 %v337, %v839
  %v848 = vxor.u32 %v844, 2147483648
  %v849 = vxor.u32 %v845, 2147483648
  %v850 = vxor.u32 %v847, 2147483648
  %v851 = vmul.f32 %v848, 1.442695
  %v852 = vpow.pop %v851
  %v853 = vmul.f32 %v849, 1.442695
  %v854 = vpow.pop %v853
  %v855 = vmul.f32 %v850, 1.442695
  %v856 = vpow.pop %v855
  %v857 = vadd.f32 %v852, 1.0
  %v858 = vadd.f32 %v854, 1.0
  %v859 = vadd.f32 %v856, 1.0
  %v860 = vrcp.pop %v857
  %v861 = vmul.f32 1.0, %v860
  %v862 = vrcp.pop %v858
  %v863 = vmul.f32 1.0, %v862
  %v864 = vrcp.pop %v859
  %v865 = vmul.f32 1.0, %v864
  %v866 = vtanh.pop %v846
  %v868 = vrot.slane %v743, 6
  %v870 = vmul.f32 %v863, %v868
  %v871 = vmul.f32 %v861, %v866
  %v872 = vadd.f32 %v870, %v871
  %v873 = vtanh.pop %v872
  %v874 = vmul.f32 %v865, %v873
  %v875 = vpack.c.bf16 %v874, %v874
  %v877 = vrot.slane %v875, 2
  %879 = vmatprep.subr.bf16.mxu0 %v435
  %880 = vmatpush1.bf16.msra.mxu0 %v434
  %881 = vmatprep.subr.bf16.mxu0 %v439
  %882 = vmatpush1.bf16.msra.mxu0 %v438
  %883 = vmatprep.subr.bf16.mxu0 %v443
  %884 = vmatpush1.bf16.msra.mxu0 %v442
  %885 = vmatprep.subr.bf16.mxu0 %v447
  %886 = vmatpush1.bf16.msra.mxu0 %v446
  %887 = vmatprep.subr.bf16.mxu0 %v451
  %888 = vmatpush1.bf16.msra.mxu0 %v450
  %889 = vmatprep.subr.bf16.mxu0 %v455
  %890 = vmatpush1.bf16.msra.mxu0 %v454
  %891 = vmatprep.subr.bf16.mxu0 %v459
  %892 = vmatpush1.bf16.msra.mxu0 %v458
  %893 = vmatprep.subr.bf16.mxu0 %v463
  %894 = vmatpush1.bf16.msra.mxu0 %v462
  %895 = vmatprep.subr.bf16.mxu0 0
  %896 = vmatpush1.bf16.msra.mxu0 0
  %897 = vmatprep.subr.bf16.mxu0 0
  %898 = vmatpush1.bf16.msra.mxu0 0
  %899 = vmatprep.subr.bf16.mxu0 0
  %900 = vmatpush1.bf16.msra.mxu0 0
  %901 = vmatprep.subr.bf16.mxu0 0
  %902 = vmatpush1.bf16.msra.mxu0 0
  %903 = vmatprep.subr.bf16.mxu0 0
  %904 = vmatpush1.bf16.msra.mxu0 0
  %905 = vmatprep.subr.bf16.mxu0 0
  %906 = vmatpush1.bf16.msra.mxu0 0
  %907 = vmatprep.subr.bf16.mxu0 0
  %908 = vmatpush1.bf16.msra.mxu0 0
  %909 = vmatprep.subr.bf16.mxu0 0
  %910 = vmatpush1.bf16.msra.mxu0 0
  %911 = vmatprep.mubr.bf16.mxu0 0
  %912 = vmatmul.mubr.bf16.gmra.mrb[0].mxu0 %v877
  %v913 = vpop.f32.mrb[0].mxu0
  %v914 = vadd.f32 0.0, %v913
  %v915 = vpop.f32.mrb[0].mxu0
  %v916 = vadd.f32 0.0, %v915
  %v917 = vpop.f32.mrb[0].mxu0
  %v918 = vpop.f32.mrb[0].mxu0
  %919 = vdwg.mxu0
  %920 = vmatprep.subr.bf16.mxu0 %v437
  %921 = vmatpush1.bf16.msra.mxu0 %v436
  %922 = vmatprep.subr.bf16.mxu0 %v441
  %923 = vmatpush1.bf16.msra.mxu0 %v440
  %924 = vmatprep.subr.bf16.mxu0 %v445
  %925 = vmatpush1.bf16.msra.mxu0 %v444
  %926 = vmatprep.subr.bf16.mxu0 %v449
  %927 = vmatpush1.bf16.msra.mxu0 %v448
  %928 = vmatprep.subr.bf16.mxu0 %v453
  %929 = vmatpush1.bf16.msra.mxu0 %v452
  %930 = vmatprep.subr.bf16.mxu0 %v457
  %931 = vmatpush1.bf16.msra.mxu0 %v456
  %932 = vmatprep.subr.bf16.mxu0 %v461
  %933 = vmatpush1.bf16.msra.mxu0 %v460
  %934 = vmatprep.subr.bf16.mxu0 %v465
  %935 = vmatpush1.bf16.msra.mxu0 %v464
  %936 = vmatprep.subr.bf16.mxu0 0
  %937 = vmatpush1.bf16.msra.mxu0 0
  %938 = vmatprep.subr.bf16.mxu0 0
  %939 = vmatpush1.bf16.msra.mxu0 0
  %940 = vmatprep.subr.bf16.mxu0 0
  %941 = vmatpush1.bf16.msra.mxu0 0
  %942 = vmatprep.subr.bf16.mxu0 0
  %943 = vmatpush1.bf16.msra.mxu0 0
  %944 = vmatprep.subr.bf16.mxu0 0
  %945 = vmatpush1.bf16.msra.mxu0 0
  %946 = vmatprep.subr.bf16.mxu0 0
  %947 = vmatpush1.bf16.msra.mxu0 0
  %948 = vmatprep.subr.bf16.mxu0 0
  %949 = vmatpush1.bf16.msra.mxu0 0
  %950 = vmatprep.subr.bf16.mxu0 0
  %951 = vmatpush1.bf16.msra.mxu0 0
  %952 = vmatprep.mubr.bf16.mxu0 0
  %953 = vmatmul.mubr.bf16.gmra.mrb[0].mxu0 %v877
  %v954 = vpop.f32.mrb[0].mxu0
  %v955 = vadd.f32 0.0, %v954
  %v956 = vpop.f32.mrb[0].mxu0
  %v957 = vadd.f32 0.0, %v956
  %v958 = vpop.f32.mrb[0].mxu0
  %v959 = vpop.f32.mrb[0].mxu0
  %960 = vdwg.mxu0
  %v965 = vrot.slane %v914, 2
  %v966 = vrot.slane %v916, 2
  %v967 = vrot.slane %v955, 2
  %v968 = vrot.slane %v957, 2
  %v973 = vadd.f32 %v616, %v965
  %v974 = vadd.f32 %v617, %v966
  %v975 = vadd.f32 %v618, %v967
  %v976 = vadd.f32 %v619, %v968
  %v977 = vxor.u32 %v973, 2147483648
  %v978 = vxor.u32 %v974, 2147483648
  %v979 = vxor.u32 %v976, 2147483648
  %v980 = vmul.f32 %v977, 1.442695
  %v981 = vpow.pop %v980
  %v982 = vmul.f32 %v978, 1.442695
  %v983 = vpow.pop %v982
  %v984 = vmul.f32 %v979, 1.442695
  %v985 = vpow.pop %v984
  %v986 = vadd.f32 %v981, 1.0
  %v987 = vadd.f32 %v983, 1.0
  %v988 = vadd.f32 %v985, 1.0
  %v989 = vrcp.pop %v986
  %v990 = vmul.f32 1.0, %v989
  %v991 = vrcp.pop %v987
  %v992 = vmul.f32 1.0, %v991
  %v993 = vrcp.pop %v988
  %v994 = vmul.f32 1.0, %v993
  %v995 = vtanh.pop %v975
  %v997 = vrot.slane %v872, 6
  %v999 = vmul.f32 %v992, %v997
  %v1000 = vmul.f32 %v990, %v995
  %v1001 = vadd.f32 %v999, %v1000
  %v1002 = vtanh.pop %v1001
  %v1003 = vmul.f32 %v994, %v1002
  %v1008 = vrot.slane %v209, 6
  %v1009 = vrot.slane %v211, 6
  %v1010 = vrot.slane %v252, 6
  %v1011 = vrot.slane %v254, 6
  %v1016 = vadd.f32 %v286, %v1008
  %v1017 = vadd.f32 %v287, %v1009
  %v1018 = vadd.f32 %v288, %v1010
  %v1019 = vadd.f32 %v289, %v1011
  %v1020 = vpack.c.bf16 %v1003, %v1003
  %v1022 = vrot.slane %v1020, 3
  %1024 = vmatprep.subr.bf16.mxu0 %v435
  %1025 = vmatpush1.bf16.msra.mxu0 %v434
  %1026 = vmatprep.subr.bf16.mxu0 %v439
  %1027 = vmatpush1.bf16.msra.mxu0 %v438
  %1028 = vmatprep.subr.bf16.mxu0 %v443
  %1029 = vmatpush1.bf16.msra.mxu0 %v442
  %1030 = vmatprep.subr.bf16.mxu0 %v447
  %1031 = vmatpush1.bf16.msra.mxu0 %v446
  %1032 = vmatprep.subr.bf16.mxu0 %v451
  %1033 = vmatpush1.bf16.msra.mxu0 %v450
  %1034 = vmatprep.subr.bf16.mxu0 %v455
  %1035 = vmatpush1.bf16.msra.mxu0 %v454
  %1036 = vmatprep.subr.bf16.mxu0 %v459
  %1037 = vmatpush1.bf16.msra.mxu0 %v458
  %1038 = vmatprep.subr.bf16.mxu0 %v463
  %1039 = vmatpush1.bf16.msra.mxu0 %v462
  %1040 = vmatprep.subr.bf16.mxu0 0
  %1041 = vmatpush1.bf16.msra.mxu0 0
  %1042 = vmatprep.subr.bf16.mxu0 0
  %1043 = vmatpush1.bf16.msra.mxu0 0
  %1044 = vmatprep.subr.bf16.mxu0 0
  %1045 = vmatpush1.bf16.msra.mxu0 0
  %1046 = vmatprep.subr.bf16.mxu0 0
  %1047 = vmatpush1.bf16.msra.mxu0 0
  %1048 = vmatprep.subr.bf16.mxu0 0
  %1049 = vmatpush1.bf16.msra.mxu0 0
  %1050 = vmatprep.subr.bf16.mxu0 0
  %1051 = vmatpush1.bf16.msra.mxu0 0
  %1052 = vmatprep.subr.bf16.mxu0 0
  %1053 = vmatpush1.bf16.msra.mxu0 0
  %1054 = vmatprep.subr.bf16.mxu0 0
  %1055 = vmatpush1.bf16.msra.mxu0 0
  %1056 = vmatprep.mubr.bf16.mxu0 0
  %1057 = vmatmul.mubr.bf16.gmra.mrb[0].mxu0 %v1022
  %v1058 = vpop.f32.mrb[0].mxu0
  %v1059 = vadd.f32 0.0, %v1058
  %v1060 = vpop.f32.mrb[0].mxu0
  %v1061 = vadd.f32 0.0, %v1060
  %v1062 = vpop.f32.mrb[0].mxu0
  %v1063 = vpop.f32.mrb[0].mxu0
  %1064 = vdwg.mxu0
  %1065 = vmatprep.subr.bf16.mxu0 %v437
  %1066 = vmatpush1.bf16.msra.mxu0 %v436
  %1067 = vmatprep.subr.bf16.mxu0 %v441
  %1068 = vmatpush1.bf16.msra.mxu0 %v440
  %1069 = vmatprep.subr.bf16.mxu0 %v445
  %1070 = vmatpush1.bf16.msra.mxu0 %v444
  %1071 = vmatprep.subr.bf16.mxu0 %v449
  %1072 = vmatpush1.bf16.msra.mxu0 %v448
  %1073 = vmatprep.subr.bf16.mxu0 %v453
  %1074 = vmatpush1.bf16.msra.mxu0 %v452
  %1075 = vmatprep.subr.bf16.mxu0 %v457
  %1076 = vmatpush1.bf16.msra.mxu0 %v456
  %1077 = vmatprep.subr.bf16.mxu0 %v461
  %1078 = vmatpush1.bf16.msra.mxu0 %v460
  %1079 = vmatprep.subr.bf16.mxu0 %v465
  %1080 = vmatpush1.bf16.msra.mxu0 %v464
  %1081 = vmatprep.subr.bf16.mxu0 0
  %1082 = vmatpush1.bf16.msra.mxu0 0
  %1083 = vmatprep.subr.bf16.mxu0 0
  %1084 = vmatpush1.bf16.msra.mxu0 0
  %1085 = vmatprep.subr.bf16.mxu0 0
  %1086 = vmatpush1.bf16.msra.mxu0 0
  %1087 = vmatprep.subr.bf16.mxu0 0
  %1088 = vmatpush1.bf16.msra.mxu0 0
  %1089 = vmatprep.subr.bf16.mxu0 0
  %1090 = vmatpush1.bf16.msra.mxu0 0
  %1091 = vmatprep.subr.bf16.mxu0 0
  %1092 = vmatpush1.bf16.msra.mxu0 0
  %1093 = vmatprep.subr.bf16.mxu0 0
  %1094 = vmatpush1.bf16.msra.mxu0 0
  %1095 = vmatprep.subr.bf16.mxu0 0
  %1096 = vmatpush1.bf16.msra.mxu0 0
  %1097 = vmatprep.mubr.bf16.mxu0 0
  %1098 = vmatmul.mubr.bf16.gmra.mrb[0].mxu0 %v1022
  %v1099 = vpop.f32.mrb[0].mxu0
  %v1100 = vadd.f32 0.0, %v1099
  %v1101 = vpop.f32.mrb[0].mxu0
  %v1102 = vadd.f32 0.0, %v1101
  %v1103 = vpop.f32.mrb[0].mxu0
  %v1104 = vpop.f32.mrb[0].mxu0
  %1105 = vdwg.mxu0
  %v1106 = vadd.f32 %v1016, %v1059
  %v1107 = vadd.f32 %v1017, %v1061
  %v1108 = vadd.f32 %v1018, %v1100
  %v1109 = vadd.f32 %v1019, %v1102
  %v1110 = vxor.u32 %v1106, 2147483648
  %v1111 = vxor.u32 %v1107, 2147483648
  %v1112 = vxor.u32 %v1109, 2147483648
  %v1113 = vmul.f32 %v1110, 1.442695
  %v1114 = vpow.pop %v1113
  %v1115 = vmul.f32 %v1111, 1.442695
  %v1116 = vpow.pop %v1115
  %v1117 = vmul.f32 %v1112, 1.442695
  %v1118 = vpow.pop %v1117
  %v1119 = vadd.f32 %v1114, 1.0
  %v1120 = vadd.f32 %v1116, 1.0
  %v1121 = vadd.f32 %v1118, 1.0
  %v1122 = vrcp.pop %v1119
  %v1123 = vmul.f32 1.0, %v1122
  %v1124 = vrcp.pop %v1120
  %v1125 = vmul.f32 1.0, %v1124
  %v1126 = vrcp.pop %v1121
  %v1127 = vmul.f32 1.0, %v1126
  %v1128 = vtanh.pop %v1108
  %v1130 = vrot.slane %v1001, 6
  %v1132 = vmul.f32 %v1125, %v1130
  %v1133 = vmul.f32 %v1123, %v1128
  %v1134 = vadd.f32 %v1132, %v1133
  %v1135 = vtanh.pop %v1134
  %v1136 = vmul.f32 %v1127, %v1135
  %v1137 = vrot.slane %v209, 2
  %v1138 = vrot.slane %v211, 2
  %v1139 = vrot.slane %v252, 2
  %v1140 = vrot.slane %v254, 2
  %v1145 = vadd.f32 %v286, %v1137
  %v1146 = vadd.f32 %v287, %v1138
  %v1147 = vadd.f32 %v288, %v1139
  %v1148 = vadd.f32 %v289, %v1140
  %v1149 = vpack.c.bf16 %v1136, %v1136
  %1150 = vmatprep.subr.bf16.mxu0 %v435
  %1151 = vmatpush1.bf16.msra.mxu0 %v434
  %1152 = vmatprep.subr.bf16.mxu0 %v439
  %1153 = vmatpush1.bf16.msra.mxu0 %v438
  %1154 = vmatprep.subr.bf16.mxu0 %v443
  %1155 = vmatpush1.bf16.msra.mxu0 %v442
  %1156 = vmatprep.subr.bf16.mxu0 %v447
  %1157 = vmatpush1.bf16.msra.mxu0 %v446
  %1158 = vmatprep.subr.bf16.mxu0 %v451
  %1159 = vmatpush1.bf16.msra.mxu0 %v450
  %1160 = vmatprep.subr.bf16.mxu0 %v455
  %1161 = vmatpush1.bf16.msra.mxu0 %v454
  %1162 = vmatprep.subr.bf16.mxu0 %v459
  %1163 = vmatpush1.bf16.msra.mxu0 %v458
  %1164 = vmatprep.subr.bf16.mxu0 %v463
  %1165 = vmatpush1.bf16.msra.mxu0 %v462
  %1166 = vmatprep.subr.bf16.mxu0 0
  %1167 = vmatpush1.bf16.msra.mxu0 0
  %1168 = vmatprep.subr.bf16.mxu0 0
  %1169 = vmatpush1.bf16.msra.mxu0 0
  %1170 = vmatprep.subr.bf16.mxu0 0
  %1171 = vmatpush1.bf16.msra.mxu0 0
  %1172 = vmatprep.subr.bf16.mxu0 0
  %1173 = vmatpush1.bf16.msra.mxu0 0
  %1174 = vmatprep.subr.bf16.mxu0 0
  %1175 = vmatpush1.bf16.msra.mxu0 0
  %1176 = vmatprep.subr.bf16.mxu0 0
  %1177 = vmatpush1.bf16.msra.mxu0 0
  %1178 = vmatprep.subr.bf16.mxu0 0
  %1179 = vmatpush1.bf16.msra.mxu0 0
  %1180 = vmatprep.subr.bf16.mxu0 0
  %1181 = vmatpush1.bf16.msra.mxu0 0
  %1182 = vmatprep.mubr.bf16.mxu0 0
  %1183 = vmatmul.mubr.bf16.gmra.mrb[0].mxu0 %v1149
  %v1184 = vpop.f32.mrb[0].mxu0
  %v1185 = vadd.f32 0.0, %v1184
  %v1186 = vpop.f32.mrb[0].mxu0
  %v1187 = vadd.f32 0.0, %v1186
  %v1188 = vpop.f32.mrb[0].mxu0
  %v1189 = vpop.f32.mrb[0].mxu0
  %1190 = vdwg.mxu0
  %1191 = vmatprep.subr.bf16.mxu0 %v437
  %1192 = vmatpush1.bf16.msra.mxu0 %v436
  %1193 = vmatprep.subr.bf16.mxu0 %v441
  %1194 = vmatpush1.bf16.msra.mxu0 %v440
  %1195 = vmatprep.subr.bf16.mxu0 %v445
  %1196 = vmatpush1.bf16.msra.mxu0 %v444
  %1197 = vmatprep.subr.bf16.mxu0 %v449
  %1198 = vmatpush1.bf16.msra.mxu0 %v448
  %1199 = vmatprep.subr.bf16.mxu0 %v453
  %1200 = vmatpush1.bf16.msra.mxu0 %v452
  %1201 = vmatprep.subr.bf16.mxu0 %v457
  %1202 = vmatpush1.bf16.msra.mxu0 %v456
  %1203 = vmatprep.subr.bf16.mxu0 %v461
  %1204 = vmatpush1.bf16.msra.mxu0 %v460
  %1205 = vmatprep.subr.bf16.mxu0 %v465
  %1206 = vmatpush1.bf16.msra.mxu0 %v464
  %1207 = vmatprep.subr.bf16.mxu0 0
  %1208 = vmatpush1.bf16.msra.mxu0 0
  %1209 = vmatprep.subr.bf16.mxu0 0
  %1210 = vmatpush1.bf16.msra.mxu0 0
  %1211 = vmatprep.subr.bf16.mxu0 0
  %1212 = vmatpush1.bf16.msra.mxu0 0
  %1213 = vmatprep.subr.bf16.mxu0 0
  %1214 = vmatpush1.bf16.msra.mxu0 0
  %1215 = vmatprep.subr.bf16.mxu0 0
  %1216 = vmatpush1.bf16.msra.mxu0 0
  %1217 = vmatprep.subr.bf16.mxu0 0
  %1218 = vmatpush1.bf16.msra.mxu0 0
  %1219 = vmatprep.subr.bf16.mxu0 0
  %1220 = vmatpush1.bf16.msra.mxu0 0
  %1221 = vmatprep.subr.bf16.mxu0 0
  %1222 = vmatpush1.bf16.msra.mxu0 0
  %1223 = vmatprep.mubr.bf16.mxu0 0
  %1224 = vmatmul.mubr.bf16.gmra.mrb[0].mxu0 %v1149
  %v1225 = vpop.f32.mrb[0].mxu0
  %v1226 = vadd.f32 0.0, %v1225
  %v1227 = vpop.f32.mrb[0].mxu0
  %v1228 = vadd.f32 0.0, %v1227
  %v1229 = vpop.f32.mrb[0].mxu0
  %v1230 = vpop.f32.mrb[0].mxu0
  %1231 = vdwg.mxu0
  %v1236 = vrot.slane %v1185, 6
  %v1237 = vrot.slane %v1187, 6
  %v1238 = vrot.slane %v1226, 6
  %v1239 = vrot.slane %v1228, 6
  %v1244 = vadd.f32 %v1145, %v1236
  %v1245 = vadd.f32 %v1146, %v1237
  %v1246 = vadd.f32 %v1147, %v1238
  %v1247 = vadd.f32 %v1148, %v1239
  %v1248 = vxor.u32 %v1244, 2147483648
  %v1249 = vxor.u32 %v1245, 2147483648
  %v1250 = vxor.u32 %v1247, 2147483648
  %v1251 = vmul.f32 %v1248, 1.442695
  %v1252 = vpow.pop %v1251
  %v1253 = vmul.f32 %v1249, 1.442695
  %v1254 = vpow.pop %v1253
  %v1255 = vmul.f32 %v1250, 1.442695
  %v1256 = vpow.pop %v1255
  %v1257 = vadd.f32 %v1252, 1.0
  %v1258 = vadd.f32 %v1254, 1.0
  %v1259 = vadd.f32 %v1256, 1.0
  %v1260 = vrcp.pop %v1257
  %v1261 = vmul.f32 1.0, %v1260
  %v1262 = vrcp.pop %v1258
  %v1263 = vmul.f32 1.0, %v1262
  %v1264 = vrcp.pop %v1259
  %v1265 = vmul.f32 1.0, %v1264
  %v1266 = vtanh.pop %v1246
  %v1268 = vrot.slane %v1134, 6
  %v1270 = vmul.f32 %v1263, %v1268
  %v1271 = vmul.f32 %v1261, %v1266
  %v1272 = vadd.f32 %v1270, %v1271
  %v1273 = vtanh.pop %v1272
  %v1274 = vmul.f32 %v1265, %v1273
  %v1275 = vpack.c.bf16 %v1274, %v1274
  %v1277 = vrot.slane %v1275, 1
  %1279 = vmatprep.subr.bf16.mxu0 %v435
  %1280 = vmatpush1.bf16.msra.mxu0 %v434
  %1281 = vmatprep.subr.bf16.mxu0 %v439
  %1282 = vmatpush1.bf16.msra.mxu0 %v438
  %1283 = vmatprep.subr.bf16.mxu0 %v443
  %1284 = vmatpush1.bf16.msra.mxu0 %v442
  %1285 = vmatprep.subr.bf16.mxu0 %v447
  %1286 = vmatpush1.bf16.msra.mxu0 %v446
  %1287 = vmatprep.subr.bf16.mxu0 %v451
  %1288 = vmatpush1.bf16.msra.mxu0 %v450
  %1289 = vmatprep.subr.bf16.mxu0 %v455
  %1290 = vmatpush1.bf16.msra.mxu0 %v454
  %1291 = vmatprep.subr.bf16.mxu0 %v459
  %1292 = vmatpush1.bf16.msra.mxu0 %v458
  %1293 = vmatprep.subr.bf16.mxu0 %v463
  %1294 = vmatpush1.bf16.msra.mxu0 %v462
  %1295 = vmatprep.subr.bf16.mxu0 0
  %1296 = vmatpush1.bf16.msra.mxu0 0
  %1297 = vmatprep.subr.bf16.mxu0 0
  %1298 = vmatpush1.bf16.msra.mxu0 0
  %1299 = vmatprep.subr.bf16.mxu0 0
  %1300 = vmatpush1.bf16.msra.mxu0 0
  %1301 = vmatprep.subr.bf16.mxu0 0
  %1302 = vmatpush1.bf16.msra.mxu0 0
  %1303 = vmatprep.subr.bf16.mxu0 0
  %1304 = vmatpush1.bf16.msra.mxu0 0
  %1305 = vmatprep.subr.bf16.mxu0 0
  %1306 = vmatpush1.bf16.msra.mxu0 0
  %1307 = vmatprep.subr.bf16.mxu0 0
  %1308 = vmatpush1.bf16.msra.mxu0 0
  %1309 = vmatprep.subr.bf16.mxu0 0
  %1310 = vmatpush1.bf16.msra.mxu0 0
  %1311 = vmatprep.mubr.bf16.mxu0 0
  %1312 = vmatmul.mubr.bf16.gmra.mrb[0].mxu0 %v1277
  %v1313 = vpop.f32.mrb[0].mxu0
  %v1314 = vadd.f32 0.0, %v1313
  %v1315 = vpop.f32.mrb[0].mxu0
  %v1316 = vadd.f32 0.0, %v1315
  %v1317 = vpop.f32.mrb[0].mxu0
  %v1318 = vpop.f32.mrb[0].mxu0
  %1319 = vdwg.mxu0
  %1320 = vmatprep.subr.bf16.mxu0 %v437
  %1321 = vmatpush1.bf16.msra.mxu0 %v436
  %1322 = vmatprep.subr.bf16.mxu0 %v441
  %1323 = vmatpush1.bf16.msra.mxu0 %v440
  %1324 = vmatprep.subr.bf16.mxu0 %v445
  %1325 = vmatpush1.bf16.msra.mxu0 %v444
  %1326 = vmatprep.subr.bf16.mxu0 %v449
  %1327 = vmatpush1.bf16.msra.mxu0 %v448
  %1328 = vmatprep.subr.bf16.mxu0 %v453
  %1329 = vmatpush1.bf16.msra.mxu0 %v452
  %1330 = vmatprep.subr.bf16.mxu0 %v457
  %1331 = vmatpush1.bf16.msra.mxu0 %v456
  %1332 = vmatprep.subr.bf16.mxu0 %v461
  %1333 = vmatpush1.bf16.msra.mxu0 %v460
  %1334 = vmatprep.subr.bf16.mxu0 %v465
  %1335 = vmatpush1.bf16.msra.mxu0 %v464
  %1336 = vmatprep.subr.bf16.mxu0 0
  %1337 = vmatpush1.bf16.msra.mxu0 0
  %1338 = vmatprep.subr.bf16.mxu0 0
  %1339 = vmatpush1.bf16.msra.mxu0 0
  %1340 = vmatprep.subr.bf16.mxu0 0
  %1341 = vmatpush1.bf16.msra.mxu0 0
  %1342 = vmatprep.subr.bf16.mxu0 0
  %1343 = vmatpush1.bf16.msra.mxu0 0
  %1344 = vmatprep.subr.bf16.mxu0 0
  %1345 = vmatpush1.bf16.msra.mxu0 0
  %1346 = vmatprep.subr.bf16.mxu0 0
  %1347 = vmatpush1.bf16.msra.mxu0 0
  %1348 = vmatprep.subr.bf16.mxu0 0
  %1349 = vmatpush1.bf16.msra.mxu0 0
  %1350 = vmatprep.subr.bf16.mxu0 0
  %1351 = vmatpush1.bf16.msra.mxu0 0
  %1352 = vmatprep.mubr.bf16.mxu0 0
  %1353 = vmatmul.mubr.bf16.gmra.mrb[0].mxu0 %v1277
  %v1354 = vpop.f32.mrb[0].mxu0
  %v1355 = vadd.f32 0.0, %v1354
  %v1356 = vpop.f32.mrb[0].mxu0
  %v1357 = vadd.f32 0.0, %v1356
  %v1358 = vpop.f32.mrb[0].mxu0
  %v1359 = vpop.f32.mrb[0].mxu0
  %1360 = vdwg.mxu0
  %v1365 = vrot.slane %v1314, 4
  %v1366 = vrot.slane %v1316, 4
  %v1367 = vrot.slane %v1355, 4
  %v1368 = vrot.slane %v1357, 4
  %v1373 = vadd.f32 %v1016, %v1365
  %v1374 = vadd.f32 %v1017, %v1366
  %v1375 = vadd.f32 %v1018, %v1367
  %v1376 = vadd.f32 %v1019, %v1368
  %v1377 = vxor.u32 %v1373, 2147483648
  %v1378 = vxor.u32 %v1374, 2147483648
  %v1379 = vxor.u32 %v1376, 2147483648
  %v1380 = vmul.f32 %v1377, 1.442695
  %v1381 = vpow.pop %v1380
  %v1382 = vmul.f32 %v1378, 1.442695
  %v1383 = vpow.pop %v1382
  %v1384 = vmul.f32 %v1379, 1.442695
  %v1385 = vpow.pop %v1384
  %v1386 = vadd.f32 %v1381, 1.0
  %v1387 = vadd.f32 %v1383, 1.0
  %v1388 = vadd.f32 %v1385, 1.0
  %v1389 = vrcp.pop %v1386
  %v1390 = vmul.f32 1.0, %v1389
  %v1391 = vrcp.pop %v1387
  %v1392 = vmul.f32 1.0, %v1391
  %v1393 = vrcp.pop %v1388
  %v1394 = vmul.f32 1.0, %v1393
  %v1395 = vtanh.pop %v1375
  %v1397 = vrot.slane %v1272, 6
  %v1399 = vmul.f32 %v1392, %v1397
  %v1400 = vmul.f32 %v1390, %v1395
  %v1401 = vadd.f32 %v1399, %v1400
  %v1402 = vtanh.pop %v1401
  %v1403 = vmul.f32 %v1394, %v1402
  %v1404 = vpack.c.bf16 %v1403, %v1403
  %v1406 = vrot.slane %v1404, 2
  %1408 = vmatprep.subr.bf16.mxu0 %v435
  %1409 = vmatpush1.bf16.msra.mxu0 %v434
  %1410 = vmatprep.subr.bf16.mxu0 %v439
  %1411 = vmatpush1.bf16.msra.mxu0 %v438
  %1412 = vmatprep.subr.bf16.mxu0 %v443
  %1413 = vmatpush1.bf16.msra.mxu0 %v442
  %1414 = vmatprep.subr.bf16.mxu0 %v447
  %1415 = vmatpush1.bf16.msra.mxu0 %v446
  %1416 = vmatprep.subr.bf16.mxu0 %v451
  %1417 = vmatpush1.bf16.msra.mxu0 %v450
  %1418 = vmatprep.subr.bf16.mxu0 %v455
  %1419 = vmatpush1.bf16.msra.mxu0 %v454
  %1420 = vmatprep.subr.bf16.mxu0 %v459
  %1421 = vmatpush1.bf16.msra.mxu0 %v458
  %1422 = vmatprep.subr.bf16.mxu0 %v463
  %1423 = vmatpush1.bf16.msra.mxu0 %v462
  %1424 = vmatprep.subr.bf16.mxu0 0
  %1425 = vmatpush1.bf16.msra.mxu0 0
  %1426 = vmatprep.subr.bf16.mxu0 0
  %1427 = vmatpush1.bf16.msra.mxu0 0
  %1428 = vmatprep.subr.bf16.mxu0 0
  %1429 = vmatpush1.bf16.msra.mxu0 0
  %1430 = vmatprep.subr.bf16.mxu0 0
  %1431 = vmatpush1.bf16.msra.mxu0 0
  %1432 = vmatprep.subr.bf16.mxu0 0
  %1433 = vmatpush1.bf16.msra.mxu0 0
  %1434 = vmatprep.subr.bf16.mxu0 0
  %1435 = vmatpush1.bf16.msra.mxu0 0
  %1436 = vmatprep.subr.bf16.mxu0 0
  %1437 = vmatpush1.bf16.msra.mxu0 0
  %1438 = vmatprep.subr.bf16.mxu0 0
  %1439 = vmatpush1.bf16.msra.mxu0 0
  %1440 = vmatprep.mubr.bf16.mxu0 0
  %1441 = vmatmul.mubr.bf16.gmra.mrb[0].mxu0 %v1406
  %v1442 = vpop.f32.mrb[0].mxu0
  %v1443 = vadd.f32 0.0, %v1442
  %v1444 = vpop.f32.mrb[0].mxu0
  %v1445 = vadd.f32 0.0, %v1444
  %v1446 = vpop.f32.mrb[0].mxu0
  %v1447 = vpop.f32.mrb[0].mxu0
  %1448 = vdwg.mxu0
  %1449 = vmatprep.subr.bf16.mxu0 %v437
  %1450 = vmatpush1.bf16.msra.mxu0 %v436
  %1451 = vmatprep.subr.bf16.mxu0 %v441
  %1452 = vmatpush1.bf16.msra.mxu0 %v440
  %1453 = vmatprep.subr.bf16.mxu0 %v445
  %1454 = vmatpush1.bf16.msra.mxu0 %v444
  %1455 = vmatprep.subr.bf16.mxu0 %v449
  %1456 = vmatpush1.bf16.msra.mxu0 %v448
  %1457 = vmatprep.subr.bf16.mxu0 %v453
  %1458 = vmatpush1.bf16.msra.mxu0 %v452
  %1459 = vmatprep.subr.bf16.mxu0 %v457
  %1460 = vmatpush1.bf16.msra.mxu0 %v456
  %1461 = vmatprep.subr.bf16.mxu0 %v461
  %1462 = vmatpush1.bf16.msra.mxu0 %v460
  %1463 = vmatprep.subr.bf16.mxu0 %v465
  %1464 = vmatpush1.bf16.msra.mxu0 %v464
  %1465 = vmatprep.subr.bf16.mxu0 0
  %1466 = vmatpush1.bf16.msra.mxu0 0
  %1467 = vmatprep.subr.bf16.mxu0 0
  %1468 = vmatpush1.bf16.msra.mxu0 0
  %1469 = vmatprep.subr.bf16.mxu0 0
  %1470 = vmatpush1.bf16.msra.mxu0 0
  %1471 = vmatprep.subr.bf16.mxu0 0
  %1472 = vmatpush1.bf16.msra.mxu0 0
  %1473 = vmatprep.subr.bf16.mxu0 0
  %1474 = vmatpush1.bf16.msra.mxu0 0
  %1475 = vmatprep.subr.bf16.mxu0 0
  %1476 = vmatpush1.bf16.msra.mxu0 0
  %1477 = vmatprep.subr.bf16.mxu0 0
  %1478 = vmatpush1.bf16.msra.mxu0 0
  %1479 = vmatprep.subr.bf16.mxu0 0
  %1480 = vmatpush1.bf16.msra.mxu0 0
  %1481 = vmatprep.mubr.bf16.mxu0 0
  %1482 = vmatmul.mubr.bf16.gmra.mrb[0].mxu0 %v1406
  %v1483 = vpop.f32.mrb[0].mxu0
  %v1484 = vadd.f32 0.0, %v1483
  %v1485 = vpop.f32.mrb[0].mxu0
  %v1486 = vadd.f32 0.0, %v1485
  %v1487 = vpop.f32.mrb[0].mxu0
  %v1488 = vpop.f32.mrb[0].mxu0
  %1489 = vdwg.mxu0
  %v1494 = vrot.slane %v1443, 2
  %v1495 = vrot.slane %v1445, 2
  %v1496 = vrot.slane %v1484, 2
  %v1497 = vrot.slane %v1486, 2
  %v1502 = vadd.f32 %v1145, %v1494
  %v1503 = vadd.f32 %v1146, %v1495
  %v1504 = vadd.f32 %v1147, %v1496
  %v1505 = vadd.f32 %v1148, %v1497
  %v1506 = vxor.u32 %v1502, 2147483648
  %v1507 = vxor.u32 %v1503, 2147483648
  %v1508 = vxor.u32 %v1505, 2147483648
  %v1509 = vmul.f32 %v1506, 1.442695
  %v1510 = vpow.pop %v1509
  %v1511 = vmul.f32 %v1507, 1.442695
  %v1512 = vpow.pop %v1511
  %v1513 = vmul.f32 %v1508, 1.442695
  %v1514 = vpow.pop %v1513
  %v1515 = vadd.f32 %v1510, 1.0
  %v1516 = vadd.f32 %v1512, 1.0
  %v1517 = vadd.f32 %v1514, 1.0
  %v1518 = vrcp.pop %v1515
  %v1519 = vmul.f32 1.0, %v1518
  %v1520 = vrcp.pop %v1516
  %v1521 = vmul.f32 1.0, %v1520
  %v1522 = vrcp.pop %v1517
  %v1523 = vmul.f32 1.0, %v1522
  %v1524 = vtanh.pop %v1504
  %v1526 = vrot.slane %v1401, 6
  %v1528 = vmul.f32 %v1521, %v1526
  %v1529 = vmul.f32 %v1519, %v1524
  %v1530 = vadd.f32 %v1528, %v1529
  %v1531 = vtanh.pop %v1530
  %v1532 = vmul.f32 %v1523, %v1531
  %v1533 = vld [vmem:[%s3 + $0x20] sm:$0xff]
  %v1534 = vld [vmem:[%s3 + $0x40] sm:$0xff]
  %v1535 = vld [vmem:[%s3 + $0x60] sm:$0xff]
  %v1536 = vld [vmem:[%s3 + $0x80] sm:$0xff]
  %v1537 = vld [vmem:[%s3 + $0xa0] sm:$0xff]
  %v1538 = vld [vmem:[%s3 + $0xc0] sm:$0xff]
  %v1539 = vld [vmem:[%s3 + $0xe0] sm:$0xff]
  %v1540 = vld [vmem:[%s3 + $0x100] sm:$0xff]
  %v1541 = vld [vmem:[%s3 + $0x120] sm:$0xff]
  %v1542 = vld [vmem:[%s3 + $0x140] sm:$0xff]
  %v1543 = vld [vmem:[%s3 + $0x160] sm:$0xff]
  %v1544 = vld [vmem:[%s3 + $0x180] sm:$0xff]
  %v1545 = vld [vmem:[%s3 + $0x1a0] sm:$0xff]
  %v1546 = vld [vmem:[%s3 + $0x1c0] sm:$0xff]
  %v1547 = vld [vmem:[%s3 + $0x1e0] sm:$0xff]
  %v1548 = vld [vmem:[%s3 + $0x200] sm:$0xff]
  %v1549 = vld [vmem:[%s3 + $0x220] ss:$0 sm:$0xff]
  %v1550 = vld [vmem:[%s3 + $0x240] sm:$0xff]
  %v1551 = vld [vmem:[%s3 + $0x260] sm:$0xff]
  %v1552 = vld [vmem:[%s3 + $0x280] sm:$0xff]
  %v1553 = vld [vmem:[%s3 + $0x2a0] sm:$0xff]
  %v1554 = vld [vmem:[%s3 + $0x2c0] ss:$0 sm:$0xff]
  %v1556 = vrot.slane %v1532, 6
  %1558 = vmatprep.subr.mxu0 0.0
  %1559 = vmatpush1.msra.mxu0 %v1533
  %1560 = vmatprep.subr.mxu0 0.0
  %1561 = vmatpush1.msra.mxu0 %v1534
  %1562 = vmatprep.subr.mxu0 0.0
  %1563 = vmatpush1.msra.mxu0 %v1535
  %1564 = vmatprep.subr.mxu0 0.0
  %1565 = vmatpush1.msra.mxu0 %v1536
  %1566 = vmatprep.subr.mxu0 0.0
  %1567 = vmatpush1.msra.mxu0 %v1537
  %1568 = vmatprep.subr.mxu0 0.0
  %1569 = vmatpush1.msra.mxu0 %v1538
  %1570 = vmatprep.subr.mxu0 0.0
  %1571 = vmatpush1.msra.mxu0 %v1539
  %1572 = vmatprep.subr.mxu0 0.0
  %1573 = vmatpush1.msra.mxu0 %v1540
  %1574 = vmatprep.subr.mxu0 0.0
  %1575 = vmatpush1.msra.mxu0 %v1541
  %1576 = vmatprep.subr.mxu0 0.0
  %1577 = vmatpush1.msra.mxu0 %v1542
  %1578 = vmatprep.subr.mxu0 0.0
  %1579 = vmatpush1.msra.mxu0 %v1543
  %1580 = vmatprep.subr.mxu0 0.0
  %1581 = vmatpush1.msra.mxu0 %v1544
  %1582 = vmatprep.subr.mxu0 0.0
  %1583 = vmatpush1.msra.mxu0 %v1545
  %1584 = vmatprep.subr.mxu0 0.0
  %1585 = vmatpush1.msra.mxu0 %v1546
  %1586 = vmatprep.subr.mxu0 0.0
  %1587 = vmatpush1.msra.mxu0 %v1547
  %1588 = vmatprep.subr.mxu0 0.0
  %1589 = vmatpush1.msra.mxu0 %v1548
  %1590 = vmatprep.subr.mxu0 0.0
  %1591 = vmatpush1.msra.mxu0 0.0
  %1592 = vmatprep.subr.mxu0 0.0
  %1593 = vmatpush1.msra.mxu0 0.0
  %1594 = vmatprep.subr.mxu0 0.0
  %1595 = vmatpush1.msra.mxu0 0.0
  %1596 = vmatprep.subr.mxu0 0.0
  %1597 = vmatpush1.msra.mxu0 0.0
  %1598 = vmatprep.subr.mxu0 0.0
  %1599 = vmatpush1.msra.mxu0 0.0
  %1600 = vmatprep.subr.mxu0 0.0
  %1601 = vmatpush1.msra.mxu0 0.0
  %1602 = vmatprep.subr.mxu0 0.0
  %1603 = vmatpush1.msra.mxu0 0.0
  %1604 = vmatprep.subr.mxu0 0.0
  %1605 = vmatpush1.msra.mxu0 0.0
  %1606 = vmatprep.subr.mxu0 0.0
  %1607 = vmatpush1.msra.mxu0 0.0
  %1608 = vmatprep.subr.mxu0 0.0
  %1609 = vmatpush1.msra.mxu0 0.0
  %1610 = vmatprep.subr.mxu0 0.0
  %1611 = vmatpush1.msra.mxu0 0.0
  %1612 = vmatprep.subr.mxu0 0.0
  %1613 = vmatpush1.msra.mxu0 0.0
  %1614 = vmatprep.subr.mxu0 0.0
  %1615 = vmatpush1.msra.mxu0 0.0
  %1616 = vmatprep.subr.mxu0 0.0
  %1617 = vmatpush1.msra.mxu0 0.0
  %1618 = vmatprep.subr.mxu0 0.0
  %1619 = vmatpush1.msra.mxu0 0.0
  %1620 = vmatprep.subr.mxu0 0.0
  %1621 = vmatpush1.msra.mxu0 0.0
  %1622 = vmatprep.mubr.f32.mxu0 0.0
  %1623 = vmatmul.mubr.f32.gmra.mrb[0].mxu0 %v1556
  %v1624 = vpop.f32.mrb[0].mxu0
  %v1625 = vadd.f32 %v1549, %v1624
  %v1626 = vpop.f32.mrb[0].mxu0
  %1627 = vdwg.mxu0
  %v1628 = vmax.f32 %v1625, 0.0
  %v1629 = vand.u32 2147483647, %v1625
  %v1630 = vsub.f32 0.0, %v1629
  %v1631 = vmul.f32 %v1630, 1.442695
  %v1632 = vpow.pop %v1631
  %v1633 = vadd.f32 %v1632, 1.0
  %v1634 = vlog2.pop %v1633
  %v1635 = vmul.f32 %v1634, 0.6931472
  %v1636 = vmul.f32 -0.5, %v1632
  %v1637 = vadd.f32 %v1636, 1.0
  %v1638 = vmul.f32 %v1637, %v1632
  %v1639 = vand.u32 2147483647, %v1632
  %vm1640 = vcmp.lt.f32.partialorder %v1639, 0.0004427343
  %v1641 = vsel %vm1640, %v1638, %v1635
  %v1642 = vadd.f32 %v1628, %v1641
  %vm1643 = vcmask 261120
  %v1645 = vsel %vm1643, %v1642, 0
  %1647 = vmatprep.subr.mxu0 0.0
  %1648 = vmatpush1.msra.mxu0 %v1550
  %1649 = vmatprep.subr.mxu0 0.0
  %1650 = vmatpush1.msra.mxu0 %v1551
  %1651 = vmatprep.subr.mxu0 0.0
  %1652 = vmatpush1.msra.mxu0 %v1552
  %1653 = vmatprep.subr.mxu0 0.0
  %1654 = vmatpush1.msra.mxu0 %v1553
  %1655 = vmatprep.subr.mxu0 0.0
  %1656 = vmatpush1.msra.mxu0 0.0
  %1657 = vmatprep.subr.mxu0 0.0
  %1658 = vmatpush1.msra.mxu0 0.0
  %1659 = vmatprep.subr.mxu0 0.0
  %1660 = vmatpush1.msra.mxu0 0.0
  %1661 = vmatprep.subr.mxu0 0.0
  %1662 = vmatpush1.msra.mxu0 0.0
  %1663 = vmatprep.subr.mxu0 0.0
  %1664 = vmatpush1.msra.mxu0 0.0
  %1665 = vmatprep.subr.mxu0 0.0
  %1666 = vmatpush1.msra.mxu0 0.0
  %1667 = vmatprep.subr.mxu0 0.0
  %1668 = vmatpush1.msra.mxu0 0.0
  %1669 = vmatprep.subr.mxu0 0.0
  %1670 = vmatpush1.msra.mxu0 0.0
  %1671 = vmatprep.subr.mxu0 0.0
  %1672 = vmatpush1.msra.mxu0 0.0
  %1673 = vmatprep.subr.mxu0 0.0
  %1674 = vmatpush1.msra.mxu0 0.0
  %1675 = vmatprep.subr.mxu0 0.0
  %1676 = vmatpush1.msra.mxu0 0.0
  %1677 = vmatprep.subr.mxu0 0.0
  %1678 = vmatpush1.msra.mxu0 0.0
  %1679 = vmatprep.subr.mxu0 0.0
  %1680 = vmatpush1.msra.mxu0 0.0
  %1681 = vmatprep.subr.mxu0 0.0
  %1682 = vmatpush1.msra.mxu0 0.0
  %1683 = vmatprep.subr.mxu0 0.0
  %1684 = vmatpush1.msra.mxu0 0.0
  %1685 = vmatprep.subr.mxu0 0.0
  %1686 = vmatpush1.msra.mxu0 0.0
  %1687 = vmatprep.subr.mxu0 0.0
  %1688 = vmatpush1.msra.mxu0 0.0
  %1689 = vmatprep.subr.mxu0 0.0
  %1690 = vmatpush1.msra.mxu0 0.0
  %1691 = vmatprep.subr.mxu0 0.0
  %1692 = vmatpush1.msra.mxu0 0.0
  %1693 = vmatprep.subr.mxu0 0.0
  %1694 = vmatpush1.msra.mxu0 0.0
  %1695 = vmatprep.subr.mxu0 0.0
  %1696 = vmatpush1.msra.mxu0 0.0
  %1697 = vmatprep.subr.mxu0 0.0
  %1698 = vmatpush1.msra.mxu0 0.0
  %1699 = vmatprep.subr.mxu0 0.0
  %1700 = vmatpush1.msra.mxu0 0.0
  %1701 = vmatprep.subr.mxu0 0.0
  %1702 = vmatpush1.msra.mxu0 0.0
  %1703 = vmatprep.subr.mxu0 0.0
  %1704 = vmatpush1.msra.mxu0 0.0
  %1705 = vmatprep.subr.mxu0 0.0
  %1706 = vmatpush1.msra.mxu0 0.0
  %1707 = vmatprep.subr.mxu0 0.0
  %1708 = vmatpush1.msra.mxu0 0.0
  %1709 = vmatprep.subr.mxu0 0.0
  %1710 = vmatpush1.msra.mxu0 0.0
  %1711 = vmatprep.mubr.f32.mxu0 0.0
  %1712 = vmatmul.mubr.f32.gmra.mrb[0].mxu0 %v1645
  %v1713 = vpop.f32.mrb[0].mxu0
  %v1714 = vadd.f32 %v1554, %v1713
  %v1715 = vpop.f32.mrb[0].mxu0
  %1716 = vdwg.mxu0
  %v1717 = vlaneseq
  %v1718 = vand.u32 %v1717, 127
  %vm1719 = vcmp.ge.s32.totalorder %v1718, 16
  %vm1720 = vcmp.lt.s32.totalorder %v1718, 32
  %vm1721 = vmand %vm1719, %vm1720
  %v1722 = vmul.f32 %v1714, 1.442695
  %v1723 = vpow.pop %v1722
  %v1724 = vsel %vm1721, %v1723, %v1714
  %1725 = vst [vmem:[%s4] sm:$0x3] %v1724
  // Predicated region
  $region18: #{vaencoder_forward.1} parent=0 // pred_check
    _
  $region19: #{vaencoder_forward.1} parent=0 // pred_check_branch
    %1727 = sbr.rel (0) target = $region21
  $region20: #{vaencoder_forward.1} parent=0 // pred_region
    _
  $region21: #{vaencoder_forward.1} parent=0 // pred_fallthru
    _
  // Predicated region
  $region22: #{vaencoder_forward.1} parent=0 // pred_check
    _
  $region23: #{vaencoder_forward.1} parent=0 // pred_check_branch
    %1729 = sbr.rel (0) target = $region25
  $region24: #{vaencoder_forward.1} parent=0 // pred_region
    _
  $region25: #{vaencoder_forward.1} parent=0 // pred_fallthru
    _

</llo_original>
